<compile_context>
chip_gen: v5e
topology: v5e:2x2
jax: 0.10.0
libtpu: 0.0.40
codegen_flags: <defaults>
</compile_context>

<pallas_src>
import functools
import math

import jax
import jax.numpy as jnp
import numpy as np
from jax.experimental import pallas as pl
from jax.experimental.pallas import tpu as pltpu


_LN_EPS = 1e-5                    # PyTorch nn.LayerNorm default
_NEG = -1e30                      # finite "masked" sentinel (underflows to 0 after exp)
_GELU_C = 0.7978845608028654      # sqrt(2/pi)


def _layernorm(x, gamma, beta):
    mu = jnp.mean(x, axis=-1, keepdims=True)
    xc = x - mu
    var = jnp.mean(xc * xc, axis=-1, keepdims=True)
    return xc * jax.lax.rsqrt(var + _LN_EPS) * gamma + beta


def _block_kernel(x_ref, mask_ref,
                  ln1_g_ref, ln1_b_ref,
                  wq_ref, bq_ref, wk_ref, bk_ref, wv_ref, bv_ref,
                  wp_ref, bp_ref,
                  ln2_g_ref, ln2_b_ref,
                  wfc_ref, bfc_ref, wmp_ref, bmp_ref,
                  o_ref, *, n_head):
    x = x_ref[0]                                          # (T, E) f32
    T, E = x.shape
    D = E // n_head

    # ---- ln_1 ----
    h1 = _layernorm(x, ln1_g_ref[...], ln1_b_ref[...])    # (T, E)

    # ---- fused, lane-dense Q/K/V projections (one (T,E)@(E,E) each) ----
    scale = 1.0 / math.sqrt(D)
    q = (jnp.dot(h1, wq_ref[...], preferred_element_type=jnp.float32)
         + bq_ref[...]) * scale                           # scale folded into Q
    k = jnp.dot(h1, wk_ref[...], preferred_element_type=jnp.float32) + bk_ref[...]
    v = jnp.dot(h1, wv_ref[...], preferred_element_type=jnp.float32) + bv_ref[...]

    mask = mask_ref[0]                                    # (1, T) int32, !=0 => padded key
    wp = wp_ref[...]                                      # (E, E)

    # ---- per-head attention, c_proj fused via per-head Wp slices ----
    attn_acc = jnp.zeros((T, E), jnp.float32)
    for h in range(n_head):
        qh = q[:, h * D:(h + 1) * D]                      # (T, D)
        kh = k[:, h * D:(h + 1) * D]
        vh = v[:, h * D:(h + 1) * D]
        # QK^T without an explicit transpose: contract last axes.
        att = jax.lax.dot_general(qh, kh, (((1,), (1,)), ((), ())),
                                  preferred_element_type=jnp.float32)   # (T, T)
        att = jnp.where(mask != 0, _NEG, att)             # mask padded key positions
        att = att - jnp.max(att, axis=-1, keepdims=True)
        p = jnp.exp(att)
        p = p * pl.reciprocal(jnp.sum(p, axis=-1, keepdims=True), approx=True)
        # attn_dropout: identity (eval mode)
        oh = jnp.dot(p, vh, preferred_element_type=jnp.float32)          # (T, D)
        attn_acc = attn_acc + jnp.dot(oh, wp[h * D:(h + 1) * D, :],
                                      preferred_element_type=jnp.float32)

    x = x + attn_acc + bp_ref[...]                        # residual (resid_dropout = id)

    # ---- ln_2 + MLP (c_fc -> GELU -> c_proj) ----
    h2 = _layernorm(x, ln2_g_ref[...], ln2_b_ref[...])
    f = jnp.dot(h2, wfc_ref[...], preferred_element_type=jnp.float32) + bfc_ref[...]
    g = 0.5 * f * (1.0 + jnp.tanh(_GELU_C * (f + 0.044715 * f * f * f)))  # GELU (tanh)
    mlp = jnp.dot(g, wmp_ref[...], preferred_element_type=jnp.float32) + bmp_ref[...]

    o_ref[0] = x + mlp                                    # lane-dense (T, E) store


def block_forward(x, padding_mask, params, *, n_head):
    """x: (B, T, E) f32, padding_mask: (B, T) bool (True = padded key) -> (B, T, E)."""
    (ln1_g, ln1_b, wq, bq, wk, bk, wv, bv, wp, bp,
     ln2_g, ln2_b, wfc, bfc, wmp, bmp) = params
    B, T, E = x.shape
    F = wfc.shape[1]
    mask_i32 = padding_mask.astype(jnp.int32).reshape(B, 1, T)

    full = lambda shape: pl.BlockSpec(shape, lambda b: tuple(0 for _ in shape))

    kernel = functools.partial(_block_kernel, n_head=n_head)
    return pl.pallas_call(
        kernel,
        out_shape=jax.ShapeDtypeStruct((B, T, E), jnp.float32),
        grid=(B,),
        in_specs=[
            pl.BlockSpec((1, T, E), lambda b: (b, 0, 0)),   # x
            pl.BlockSpec((1, 1, T), lambda b: (b, 0, 0)),   # padding mask (int32)
            full((1, E)), full((1, E)),                     # ln_1 gamma / beta
            full((E, E)), full((1, E)),                     # Wq / bq (fused over heads)
            full((E, E)), full((1, E)),                     # Wk / bk
            full((E, E)), full((1, E)),                     # Wv / bv
            full((E, E)), full((1, E)),                     # Wp / bp (attn c_proj)
            full((1, E)), full((1, E)),                     # ln_2 gamma / beta
            full((E, F)), full((1, F)),                     # MLP c_fc
            full((F, E)), full((1, E)),                     # MLP c_proj
        ],
        out_specs=pl.BlockSpec((1, T, E), lambda b: (b, 0, 0)),
        compiler_params=pltpu.CompilerParams(
            dimension_semantics=("parallel",)),
    )(x, mask_i32, ln1_g, ln1_b, wq, bq, wk, bk, wv, bv, wp, bp,
      ln2_g, ln2_b, wfc, bfc, wmp, bmp)


def _init_params(key, n_embd):
    """Deterministic synthetic init (weights stored as (in, out); heads fused)."""
    ks = jax.random.split(key, 12)
    s = 0.02
    ln1_g = jnp.ones((1, n_embd), jnp.float32)
    ln1_b = jnp.zeros((1, n_embd), jnp.float32)
    ln2_g = jnp.ones((1, n_embd), jnp.float32)
    ln2_b = jnp.zeros((1, n_embd), jnp.float32)
    wq = s * jax.random.normal(ks[0], (n_embd, n_embd), jnp.float32)
    bq = s * jax.random.normal(ks[1], (1, n_embd), jnp.float32)
    wk = s * jax.random.normal(ks[2], (n_embd, n_embd), jnp.float32)
    bk = s * jax.random.normal(ks[3], (1, n_embd), jnp.float32)
    wv = s * jax.random.normal(ks[4], (n_embd, n_embd), jnp.float32)
    bv = s * jax.random.normal(ks[5], (1, n_embd), jnp.float32)
    wp = s * jax.random.normal(ks[6], (n_embd, n_embd), jnp.float32)
    bp = s * jax.random.normal(ks[7], (1, n_embd), jnp.float32)
    wfc = s * jax.random.normal(ks[8], (n_embd, 4 * n_embd), jnp.float32)
    bfc = s * jax.random.normal(ks[9], (1, 4 * n_embd), jnp.float32)
    wmp = s * jax.random.normal(ks[10], (4 * n_embd, n_embd), jnp.float32)
    bmp = s * jax.random.normal(ks[11], (1, n_embd), jnp.float32)
    return (ln1_g, ln1_b, wq, bq, wk, bk, wv, bv, wp, bp,
            ln2_g, ln2_b, wfc, bfc, wmp, bmp)


def _reference(x, padding_mask, params, n_head):
    """Pure numpy float64 reference of Block.forward (eval mode)."""
    (ln1_g, ln1_b, wq, bq, wk, bk, wv, bv, wp, bp,
     ln2_g, ln2_b, wfc, bfc, wmp, bmp) = [np.asarray(p, np.float64) for p in params]
    x = np.asarray(x, np.float64)
    mask = np.asarray(padding_mask)                       # (B, T) bool
    B, T, E = x.shape
    D = E // n_head

    def ln(v, g, b):
        mu = v.mean(-1, keepdims=True)
        var = ((v - mu) ** 2).mean(-1, keepdims=True)
        return (v - mu) / np.sqrt(var + _LN_EPS) * g + b

    h1 = ln(x, ln1_g, ln1_b)
    q = h1 @ wq + bq
    k = h1 @ wk + bk
    v = h1 @ wv + bv
    heads = []
    for h in range(n_head):
        qh, kh, vh = (a[..., h * D:(h + 1) * D] for a in (q, k, v))
        att = (qh @ np.swapaxes(kh, -2, -1)) / math.sqrt(D)
        att = np.where(mask[:, None, :], -np.inf, att)
        att = att - att.max(-1, keepdims=True)
        p = np.exp(att)
        p = p / p.sum(-1, keepdims=True)
        heads.append(p @ vh)
    y = np.concatenate(heads, axis=-1)
    x = x + (y @ wp + bp)

    h2 = ln(x, ln2_g, ln2_b)
    f = h2 @ wfc + bfc
    g = 0.5 * f * (1.0 + np.tanh(_GELU_C * (f + 0.044715 * f ** 3)))
    return x + (g @ wmp + bmp)


if __name__ == "__main__":
    B, T, n_embd, n_head = 2, 8, 32, 4

    key = jax.random.PRNGKey(0)
    k_x, k_p = jax.random.split(key)
    x = jax.random.normal(k_x, (B, T, n_embd), jnp.float32)
    # padding mask: last 2 key positions of batch 1 are padded, batch 0 has none
    padding_mask = jnp.zeros((B, T), jnp.bool_).at[1, -2:].set(True)

    params = _init_params(k_p, n_embd)

    out = block_forward(x, padding_mask, params, n_head=n_head)
    out = jax.block_until_ready(out)

    ref = _reference(x, padding_mask, params, n_head)
    assert out.shape == (B, T, n_embd)
    err = np.max(np.abs(np.asarray(out, np.float64) - ref))
    assert np.allclose(np.asarray(out), ref, atol=2e-3, rtol=2e-3), f"max abs err {err}"

    print("KERNEL_OK")
</pallas_src>

<mosaic_0001>
module attributes {stable_mosaic.version = 11 : i64} {
  func.func @_block_kernel(%arg0: i32, %arg1: memref<1x8x32xf32, #tpu.memory_space<vmem>>, %arg2: memref<1x1x8xi32, #tpu.memory_space<vmem>>, %arg3: memref<1x32xf32, #tpu.memory_space<vmem>>, %arg4: memref<1x32xf32, #tpu.memory_space<vmem>>, %arg5: memref<32x32xf32, #tpu.memory_space<vmem>>, %arg6: memref<1x32xf32, #tpu.memory_space<vmem>>, %arg7: memref<32x32xf32, #tpu.memory_space<vmem>>, %arg8: memref<1x32xf32, #tpu.memory_space<vmem>>, %arg9: memref<32x32xf32, #tpu.memory_space<vmem>>, %arg10: memref<1x32xf32, #tpu.memory_space<vmem>>, %arg11: memref<32x32xf32, #tpu.memory_space<vmem>>, %arg12: memref<1x32xf32, #tpu.memory_space<vmem>>, %arg13: memref<1x32xf32, #tpu.memory_space<vmem>>, %arg14: memref<1x32xf32, #tpu.memory_space<vmem>>, %arg15: memref<32x128xf32, #tpu.memory_space<vmem>>, %arg16: memref<1x128xf32, #tpu.memory_space<vmem>>, %arg17: memref<128x32xf32, #tpu.memory_space<vmem>>, %arg18: memref<1x32xf32, #tpu.memory_space<vmem>>, %arg19: memref<1x8x32xf32, #tpu.memory_space<vmem>>) attributes {dimension_semantics = [#tpu.dimension_semantics<parallel>], iteration_bounds = array<i64: 2>, scalar_prefetch = 0 : i64, scratch_operands = 0 : i64, tpu.core_type = #tpu.core_type<tc>, window_params = [{transform_indices = @transform_0, window_bounds = array<i64: 1, 8, 32>}, {transform_indices = @transform_1, window_bounds = array<i64: 1, 1, 8>}, {pipeline_mode = #tpu.pipeline_mode<synchronous>, transform_indices = @transform_2, window_bounds = array<i64: 1, 32>}, {pipeline_mode = #tpu.pipeline_mode<synchronous>, transform_indices = @transform_3, window_bounds = array<i64: 1, 32>}, {pipeline_mode = #tpu.pipeline_mode<synchronous>, transform_indices = @transform_4, window_bounds = array<i64: 32, 32>}, {pipeline_mode = #tpu.pipeline_mode<synchronous>, transform_indices = @transform_5, window_bounds = array<i64: 1, 32>}, {pipeline_mode = #tpu.pipeline_mode<synchronous>, transform_indices = @transform_6, window_bounds = array<i64: 32, 32>}, {pipeline_mode = #tpu.pipeline_mode<synchronous>, transform_indices = @transform_7, window_bounds = array<i64: 1, 32>}, {pipeline_mode = #tpu.pipeline_mode<synchronous>, transform_indices = @transform_8, window_bounds = array<i64: 32, 32>}, {pipeline_mode = #tpu.pipeline_mode<synchronous>, transform_indices = @transform_9, window_bounds = array<i64: 1, 32>}, {pipeline_mode = #tpu.pipeline_mode<synchronous>, transform_indices = @transform_10, window_bounds = array<i64: 32, 32>}, {pipeline_mode = #tpu.pipeline_mode<synchronous>, transform_indices = @transform_11, window_bounds = array<i64: 1, 32>}, {pipeline_mode = #tpu.pipeline_mode<synchronous>, transform_indices = @transform_12, window_bounds = array<i64: 1, 32>}, {pipeline_mode = #tpu.pipeline_mode<synchronous>, transform_indices = @transform_13, window_bounds = array<i64: 1, 32>}, {pipeline_mode = #tpu.pipeline_mode<synchronous>, transform_indices = @transform_14, window_bounds = array<i64: 32, 128>}, {pipeline_mode = #tpu.pipeline_mode<synchronous>, transform_indices = @transform_15, window_bounds = array<i64: 1, 128>}, {pipeline_mode = #tpu.pipeline_mode<synchronous>, transform_indices = @transform_16, window_bounds = array<i64: 128, 32>}, {pipeline_mode = #tpu.pipeline_mode<synchronous>, transform_indices = @transform_17, window_bounds = array<i64: 1, 32>}, {transform_indices = @transform_18, window_bounds = array<i64: 1, 8, 32>}]} {
    %c0 = arith.constant 0 : index
    %c0_0 = arith.constant 0 : index
    %c0_1 = arith.constant 0 : index
    %0 = vector.load %arg1[%c0, %c0_0, %c0_1] : memref<1x8x32xf32, #tpu.memory_space<vmem>>, vector<1x8x32xf32>
    %1 = vector.shape_cast %0 : vector<1x8x32xf32> to vector<8x32xf32>
    %c0_2 = arith.constant 0 : index
    %c0_3 = arith.constant 0 : index
    %2 = vector.load %arg3[%c0_2, %c0_3] : memref<1x32xf32, #tpu.memory_space<vmem>>, vector<1x32xf32>
    %c0_4 = arith.constant 0 : index
    %c0_5 = arith.constant 0 : index
    %3 = vector.load %arg4[%c0_4, %c0_5] : memref<1x32xf32, #tpu.memory_space<vmem>>, vector<1x32xf32>
    %cst = arith.constant dense<0.000000e+00> : vector<8xf32>
    %4 = vector.multi_reduction <add>, %1, %cst [1] : vector<8x32xf32> to vector<8xf32>
    %5 = vector.shape_cast %4 : vector<8xf32> to vector<8x1xf32>
    %cst_6 = arith.constant 3.200000e+01 : f32
    %6 = vector.broadcast %cst_6 : f32 to vector<8x1xf32>
    %7 = arith.divf %5, %6 : vector<8x1xf32>
    %8 = vector.broadcast %7 : vector<8x1xf32> to vector<8x32xf32>
    %9 = arith.subf %1, %8 : vector<8x32xf32>
    %10 = arith.mulf %9, %9 : vector<8x32xf32>
    %cst_7 = arith.constant dense<0.000000e+00> : vector<8xf32>
    %11 = vector.multi_reduction <add>, %10, %cst_7 [1] : vector<8x32xf32> to vector<8xf32>
    %12 = vector.shape_cast %11 : vector<8xf32> to vector<8x1xf32>
    %cst_8 = arith.constant 3.200000e+01 : f32
    %13 = vector.broadcast %cst_8 : f32 to vector<8x1xf32>
    %14 = arith.divf %12, %13 : vector<8x1xf32>
    %cst_9 = arith.constant 9.99999974E-6 : f32
    %15 = vector.broadcast %cst_9 : f32 to vector<8x1xf32>
    %16 = arith.addf %14, %15 : vector<8x1xf32>
    %17 = math.rsqrt %16 : vector<8x1xf32>
    %18 = vector.broadcast %17 : vector<8x1xf32> to vector<8x32xf32>
    %19 = arith.mulf %9, %18 : vector<8x32xf32>
    %20 = vector.broadcast %2 : vector<1x32xf32> to vector<8x32xf32>
    %21 = arith.mulf %19, %20 : vector<8x32xf32>
    %22 = vector.broadcast %3 : vector<1x32xf32> to vector<8x32xf32>
    %23 = arith.addf %21, %22 : vector<8x32xf32>
    %c0_10 = arith.constant 0 : index
    %c0_11 = arith.constant 0 : index
    %24 = vector.load %arg5[%c0_10, %c0_11] : memref<32x32xf32, #tpu.memory_space<vmem>>, vector<32x32xf32>
    %cst_12 = arith.constant dense<0.000000e+00> : vector<8x32xf32>
    %25 = tpu.matmul %23, %24, %cst_12 {dimension_numbers = #tpu.dot_dimension_numbers<[1], [0], [0], [1], [0, 0, 1, 1], [], []>} : vector<8x32xf32>, vector<32x32xf32>, vector<8x32xf32> -> vector<8x32xf32>
    %c0_13 = arith.constant 0 : index
    %c0_14 = arith.constant 0 : index
    %26 = vector.load %arg6[%c0_13, %c0_14] : memref<1x32xf32, #tpu.memory_space<vmem>>, vector<1x32xf32>
    %27 = vector.broadcast %26 : vector<1x32xf32> to vector<8x32xf32>
    %28 = arith.addf %25, %27 : vector<8x32xf32>
    %cst_15 = arith.constant 0.353553385 : f32
    %29 = vector.broadcast %cst_15 : f32 to vector<8x32xf32>
    %30 = arith.mulf %28, %29 : vector<8x32xf32>
    %c0_16 = arith.constant 0 : index
    %c0_17 = arith.constant 0 : index
    %31 = vector.load %arg7[%c0_16, %c0_17] : memref<32x32xf32, #tpu.memory_space<vmem>>, vector<32x32xf32>
    %cst_18 = arith.constant dense<0.000000e+00> : vector<8x32xf32>
    %32 = tpu.matmul %23, %31, %cst_18 {dimension_numbers = #tpu.dot_dimension_numbers<[1], [0], [0], [1], [0, 0, 1, 1], [], []>} : vector<8x32xf32>, vector<32x32xf32>, vector<8x32xf32> -> vector<8x32xf32>
    %c0_19 = arith.constant 0 : index
    %c0_20 = arith.constant 0 : index
    %33 = vector.load %arg8[%c0_19, %c0_20] : memref<1x32xf32, #tpu.memory_space<vmem>>, vector<1x32xf32>
    %34 = vector.broadcast %33 : vector<1x32xf32> to vector<8x32xf32>
    %35 = arith.addf %32, %34 : vector<8x32xf32>
    %c0_21 = arith.constant 0 : index
    %c0_22 = arith.constant 0 : index
    %36 = vector.load %arg9[%c0_21, %c0_22] : memref<32x32xf32, #tpu.memory_space<vmem>>, vector<32x32xf32>
    %cst_23 = arith.constant dense<0.000000e+00> : vector<8x32xf32>
    %37 = tpu.matmul %23, %36, %cst_23 {dimension_numbers = #tpu.dot_dimension_numbers<[1], [0], [0], [1], [0, 0, 1, 1], [], []>} : vector<8x32xf32>, vector<32x32xf32>, vector<8x32xf32> -> vector<8x32xf32>
    %c0_24 = arith.constant 0 : index
    %c0_25 = arith.constant 0 : index
    %38 = vector.load %arg10[%c0_24, %c0_25] : memref<1x32xf32, #tpu.memory_space<vmem>>, vector<1x32xf32>
    %39 = vector.broadcast %38 : vector<1x32xf32> to vector<8x32xf32>
    %40 = arith.addf %37, %39 : vector<8x32xf32>
    %c0_26 = arith.constant 0 : index
    %c0_27 = arith.constant 0 : index
    %c0_28 = arith.constant 0 : index
    %41 = vector.load %arg2[%c0_26, %c0_27, %c0_28] : memref<1x1x8xi32, #tpu.memory_space<vmem>>, vector<1x1x8xi32>
    %42 = vector.shape_cast %41 : vector<1x1x8xi32> to vector<1x8xi32>
    %c0_29 = arith.constant 0 : index
    %c0_30 = arith.constant 0 : index
    %43 = vector.load %arg11[%c0_29, %c0_30] : memref<32x32xf32, #tpu.memory_space<vmem>>, vector<32x32xf32>
    %cst_31 = arith.constant 0.000000e+00 : f32
    %44 = vector.broadcast %cst_31 : f32 to vector<8x32xf32>
    %45 = vector.extract_strided_slice %30 {offsets = [0, 0], sizes = [8, 8], strides = [1, 1]} : vector<8x32xf32> to vector<8x8xf32>
    %46 = vector.extract_strided_slice %35 {offsets = [0, 0], sizes = [8, 8], strides = [1, 1]} : vector<8x32xf32> to vector<8x8xf32>
    %47 = vector.extract_strided_slice %40 {offsets = [0, 0], sizes = [8, 8], strides = [1, 1]} : vector<8x32xf32> to vector<8x8xf32>
    %cst_32 = arith.constant dense<0.000000e+00> : vector<8x8xf32>
    %48 = tpu.matmul %45, %46, %cst_32 {dimension_numbers = #tpu.dot_dimension_numbers<[1], [1], [0], [0], [0, 0, 1, 0], [], []>} : vector<8x8xf32>, vector<8x8xf32>, vector<8x8xf32> -> vector<8x8xf32>
    %c0_i32 = arith.constant 0 : i32
    %49 = vector.broadcast %c0_i32 : i32 to vector<1x8xi32>
    %50 = arith.cmpi ne, %42, %49 : vector<1x8xi32>
    %cst_33 = arith.constant -1.000000e+30 : f32
    %51 = vector.shape_cast %50 : vector<1x8xi1> to vector<1x8xi1>
    %52 = vector.broadcast %51 : vector<1x8xi1> to vector<8x8xi1>
    %53 = vector.broadcast %cst_33 : f32 to vector<8x8xf32>
    %54 = arith.select %52, %53, %48 : vector<8x8xi1>, vector<8x8xf32>
    %cst_34 = arith.constant dense<0xFF800000> : vector<8xf32>
    %55 = vector.multi_reduction <maximumf>, %54, %cst_34 [1] : vector<8x8xf32> to vector<8xf32>
    %56 = vector.shape_cast %55 : vector<8xf32> to vector<8x1xf32>
    %57 = vector.broadcast %56 : vector<8x1xf32> to vector<8x8xf32>
    %58 = arith.subf %54, %57 : vector<8x8xf32>
    %59 = math.exp %58 : vector<8x8xf32>
    %cst_35 = arith.constant dense<0.000000e+00> : vector<8xf32>
    %60 = vector.multi_reduction <add>, %59, %cst_35 [1] : vector<8x8xf32> to vector<8xf32>
    %61 = vector.shape_cast %60 : vector<8xf32> to vector<8x1xf32>
    %62 = tpu.reciprocal %61 {approx = true} : vector<8x1xf32> -> vector<8x1xf32>
    %63 = vector.broadcast %62 : vector<8x1xf32> to vector<8x8xf32>
    %64 = arith.mulf %59, %63 : vector<8x8xf32>
    %cst_36 = arith.constant dense<0.000000e+00> : vector<8x8xf32>
    %65 = tpu.matmul %64, %47, %cst_36 {dimension_numbers = #tpu.dot_dimension_numbers<[1], [0], [0], [1], [0, 0, 1, 1], [], []>} : vector<8x8xf32>, vector<8x8xf32>, vector<8x8xf32> -> vector<8x8xf32>
    %66 = vector.extract_strided_slice %43 {offsets = [0, 0], sizes = [8, 32], strides = [1, 1]} : vector<32x32xf32> to vector<8x32xf32>
    %cst_37 = arith.constant dense<0.000000e+00> : vector<8x32xf32>
    %67 = tpu.matmul %65, %66, %cst_37 {dimension_numbers = #tpu.dot_dimension_numbers<[1], [0], [0], [1], [0, 0, 1, 1], [], []>} : vector<8x8xf32>, vector<8x32xf32>, vector<8x32xf32> -> vector<8x32xf32>
    %68 = arith.addf %44, %67 : vector<8x32xf32>
    %69 = vector.extract_strided_slice %30 {offsets = [0, 8], sizes = [8, 8], strides = [1, 1]} : vector<8x32xf32> to vector<8x8xf32>
    %70 = vector.extract_strided_slice %35 {offsets = [0, 8], sizes = [8, 8], strides = [1, 1]} : vector<8x32xf32> to vector<8x8xf32>
    %71 = vector.extract_strided_slice %40 {offsets = [0, 8], sizes = [8, 8], strides = [1, 1]} : vector<8x32xf32> to vector<8x8xf32>
    %cst_38 = arith.constant dense<0.000000e+00> : vector<8x8xf32>
    %72 = tpu.matmul %69, %70, %cst_38 {dimension_numbers = #tpu.dot_dimension_numbers<[1], [1], [0], [0], [0, 0, 1, 0], [], []>} : vector<8x8xf32>, vector<8x8xf32>, vector<8x8xf32> -> vector<8x8xf32>
    %c0_i32_39 = arith.constant 0 : i32
    %73 = vector.broadcast %c0_i32_39 : i32 to vector<1x8xi32>
    %74 = arith.cmpi ne, %42, %73 : vector<1x8xi32>
    %cst_40 = arith.constant -1.000000e+30 : f32
    %75 = vector.shape_cast %74 : vector<1x8xi1> to vector<1x8xi1>
    %76 = vector.broadcast %75 : vector<1x8xi1> to vector<8x8xi1>
    %77 = vector.broadcast %cst_40 : f32 to vector<8x8xf32>
    %78 = arith.select %76, %77, %72 : vector<8x8xi1>, vector<8x8xf32>
    %cst_41 = arith.constant dense<0xFF800000> : vector<8xf32>
    %79 = vector.multi_reduction <maximumf>, %78, %cst_41 [1] : vector<8x8xf32> to vector<8xf32>
    %80 = vector.shape_cast %79 : vector<8xf32> to vector<8x1xf32>
    %81 = vector.broadcast %80 : vector<8x1xf32> to vector<8x8xf32>
    %82 = arith.subf %78, %81 : vector<8x8xf32>
    %83 = math.exp %82 : vector<8x8xf32>
    %cst_42 = arith.constant dense<0.000000e+00> : vector<8xf32>
    %84 = vector.multi_reduction <add>, %83, %cst_42 [1] : vector<8x8xf32> to vector<8xf32>
    %85 = vector.shape_cast %84 : vector<8xf32> to vector<8x1xf32>
    %86 = tpu.reciprocal %85 {approx = true} : vector<8x1xf32> -> vector<8x1xf32>
    %87 = vector.broadcast %86 : vector<8x1xf32> to vector<8x8xf32>
    %88 = arith.mulf %83, %87 : vector<8x8xf32>
    %cst_43 = arith.constant dense<0.000000e+00> : vector<8x8xf32>
    %89 = tpu.matmul %88, %71, %cst_43 {dimension_numbers = #tpu.dot_dimension_numbers<[1], [0], [0], [1], [0, 0, 1, 1], [], []>} : vector<8x8xf32>, vector<8x8xf32>, vector<8x8xf32> -> vector<8x8xf32>
    %90 = vector.extract_strided_slice %43 {offsets = [8, 0], sizes = [8, 32], strides = [1, 1]} : vector<32x32xf32> to vector<8x32xf32>
    %cst_44 = arith.constant dense<0.000000e+00> : vector<8x32xf32>
    %91 = tpu.matmul %89, %90, %cst_44 {dimension_numbers = #tpu.dot_dimension_numbers<[1], [0], [0], [1], [0, 0, 1, 1], [], []>} : vector<8x8xf32>, vector<8x32xf32>, vector<8x32xf32> -> vector<8x32xf32>
    %92 = arith.addf %68, %91 : vector<8x32xf32>
    %93 = vector.extract_strided_slice %30 {offsets = [0, 16], sizes = [8, 8], strides = [1, 1]} : vector<8x32xf32> to vector<8x8xf32>
    %94 = vector.extract_strided_slice %35 {offsets = [0, 16], sizes = [8, 8], strides = [1, 1]} : vector<8x32xf32> to vector<8x8xf32>
    %95 = vector.extract_strided_slice %40 {offsets = [0, 16], sizes = [8, 8], strides = [1, 1]} : vector<8x32xf32> to vector<8x8xf32>
    %cst_45 = arith.constant dense<0.000000e+00> : vector<8x8xf32>
    %96 = tpu.matmul %93, %94, %cst_45 {dimension_numbers = #tpu.dot_dimension_numbers<[1], [1], [0], [0], [0, 0, 1, 0], [], []>} : vector<8x8xf32>, vector<8x8xf32>, vector<8x8xf32> -> vector<8x8xf32>
    %c0_i32_46 = arith.constant 0 : i32
    %97 = vector.broadcast %c0_i32_46 : i32 to vector<1x8xi32>
    %98 = arith.cmpi ne, %42, %97 : vector<1x8xi32>
    %cst_47 = arith.constant -1.000000e+30 : f32
    %99 = vector.shape_cast %98 : vector<1x8xi1> to vector<1x8xi1>
    %100 = vector.broadcast %99 : vector<1x8xi1> to vector<8x8xi1>
    %101 = vector.broadcast %cst_47 : f32 to vector<8x8xf32>
    %102 = arith.select %100, %101, %96 : vector<8x8xi1>, vector<8x8xf32>
    %cst_48 = arith.constant dense<0xFF800000> : vector<8xf32>
    %103 = vector.multi_reduction <maximumf>, %102, %cst_48 [1] : vector<8x8xf32> to vector<8xf32>
    %104 = vector.shape_cast %103 : vector<8xf32> to vector<8x1xf32>
    %105 = vector.broadcast %104 : vector<8x1xf32> to vector<8x8xf32>
    %106 = arith.subf %102, %105 : vector<8x8xf32>
    %107 = math.exp %106 : vector<8x8xf32>
    %cst_49 = arith.constant dense<0.000000e+00> : vector<8xf32>
    %108 = vector.multi_reduction <add>, %107, %cst_49 [1] : vector<8x8xf32> to vector<8xf32>
    %109 = vector.shape_cast %108 : vector<8xf32> to vector<8x1xf32>
    %110 = tpu.reciprocal %109 {approx = true} : vector<8x1xf32> -> vector<8x1xf32>
    %111 = vector.broadcast %110 : vector<8x1xf32> to vector<8x8xf32>
    %112 = arith.mulf %107, %111 : vector<8x8xf32>
    %cst_50 = arith.constant dense<0.000000e+00> : vector<8x8xf32>
    %113 = tpu.matmul %112, %95, %cst_50 {dimension_numbers = #tpu.dot_dimension_numbers<[1], [0], [0], [1], [0, 0, 1, 1], [], []>} : vector<8x8xf32>, vector<8x8xf32>, vector<8x8xf32> -> vector<8x8xf32>
    %114 = vector.extract_strided_slice %43 {offsets = [16, 0], sizes = [8, 32], strides = [1, 1]} : vector<32x32xf32> to vector<8x32xf32>
    %cst_51 = arith.constant dense<0.000000e+00> : vector<8x32xf32>
    %115 = tpu.matmul %113, %114, %cst_51 {dimension_numbers = #tpu.dot_dimension_numbers<[1], [0], [0], [1], [0, 0, 1, 1], [], []>} : vector<8x8xf32>, vector<8x32xf32>, vector<8x32xf32> -> vector<8x32xf32>
    %116 = arith.addf %92, %115 : vector<8x32xf32>
    %117 = vector.extract_strided_slice %30 {offsets = [0, 24], sizes = [8, 8], strides = [1, 1]} : vector<8x32xf32> to vector<8x8xf32>
    %118 = vector.extract_strided_slice %35 {offsets = [0, 24], sizes = [8, 8], strides = [1, 1]} : vector<8x32xf32> to vector<8x8xf32>
    %119 = vector.extract_strided_slice %40 {offsets = [0, 24], sizes = [8, 8], strides = [1, 1]} : vector<8x32xf32> to vector<8x8xf32>
    %cst_52 = arith.constant dense<0.000000e+00> : vector<8x8xf32>
    %120 = tpu.matmul %117, %118, %cst_52 {dimension_numbers = #tpu.dot_dimension_numbers<[1], [1], [0], [0], [0, 0, 1, 0], [], []>} : vector<8x8xf32>, vector<8x8xf32>, vector<8x8xf32> -> vector<8x8xf32>
    %c0_i32_53 = arith.constant 0 : i32
    %121 = vector.broadcast %c0_i32_53 : i32 to vector<1x8xi32>
    %122 = arith.cmpi ne, %42, %121 : vector<1x8xi32>
    %cst_54 = arith.constant -1.000000e+30 : f32
    %123 = vector.shape_cast %122 : vector<1x8xi1> to vector<1x8xi1>
    %124 = vector.broadcast %123 : vector<1x8xi1> to vector<8x8xi1>
    %125 = vector.broadcast %cst_54 : f32 to vector<8x8xf32>
    %126 = arith.select %124, %125, %120 : vector<8x8xi1>, vector<8x8xf32>
    %cst_55 = arith.constant dense<0xFF800000> : vector<8xf32>
    %127 = vector.multi_reduction <maximumf>, %126, %cst_55 [1] : vector<8x8xf32> to vector<8xf32>
    %128 = vector.shape_cast %127 : vector<8xf32> to vector<8x1xf32>
    %129 = vector.broadcast %128 : vector<8x1xf32> to vector<8x8xf32>
    %130 = arith.subf %126, %129 : vector<8x8xf32>
    %131 = math.exp %130 : vector<8x8xf32>
    %cst_56 = arith.constant dense<0.000000e+00> : vector<8xf32>
    %132 = vector.multi_reduction <add>, %131, %cst_56 [1] : vector<8x8xf32> to vector<8xf32>
    %133 = vector.shape_cast %132 : vector<8xf32> to vector<8x1xf32>
    %134 = tpu.reciprocal %133 {approx = true} : vector<8x1xf32> -> vector<8x1xf32>
    %135 = vector.broadcast %134 : vector<8x1xf32> to vector<8x8xf32>
    %136 = arith.mulf %131, %135 : vector<8x8xf32>
    %cst_57 = arith.constant dense<0.000000e+00> : vector<8x8xf32>
    %137 = tpu.matmul %136, %119, %cst_57 {dimension_numbers = #tpu.dot_dimension_numbers<[1], [0], [0], [1], [0, 0, 1, 1], [], []>} : vector<8x8xf32>, vector<8x8xf32>, vector<8x8xf32> -> vector<8x8xf32>
    %138 = vector.extract_strided_slice %43 {offsets = [24, 0], sizes = [8, 32], strides = [1, 1]} : vector<32x32xf32> to vector<8x32xf32>
    %cst_58 = arith.constant dense<0.000000e+00> : vector<8x32xf32>
    %139 = tpu.matmul %137, %138, %cst_58 {dimension_numbers = #tpu.dot_dimension_numbers<[1], [0], [0], [1], [0, 0, 1, 1], [], []>} : vector<8x8xf32>, vector<8x32xf32>, vector<8x32xf32> -> vector<8x32xf32>
    %140 = arith.addf %116, %139 : vector<8x32xf32>
    %141 = arith.addf %1, %140 : vector<8x32xf32>
    %c0_59 = arith.constant 0 : index
    %c0_60 = arith.constant 0 : index
    %142 = vector.load %arg12[%c0_59, %c0_60] : memref<1x32xf32, #tpu.memory_space<vmem>>, vector<1x32xf32>
    %143 = vector.broadcast %142 : vector<1x32xf32> to vector<8x32xf32>
    %144 = arith.addf %141, %143 : vector<8x32xf32>
    %c0_61 = arith.constant 0 : index
    %c0_62 = arith.constant 0 : index
    %145 = vector.load %arg13[%c0_61, %c0_62] : memref<1x32xf32, #tpu.memory_space<vmem>>, vector<1x32xf32>
    %c0_63 = arith.constant 0 : index
    %c0_64 = arith.constant 0 : index
    %146 = vector.load %arg14[%c0_63, %c0_64] : memref<1x32xf32, #tpu.memory_space<vmem>>, vector<1x32xf32>
    %cst_65 = arith.constant dense<0.000000e+00> : vector<8xf32>
    %147 = vector.multi_reduction <add>, %144, %cst_65 [1] : vector<8x32xf32> to vector<8xf32>
    %148 = vector.shape_cast %147 : vector<8xf32> to vector<8x1xf32>
    %cst_66 = arith.constant 3.200000e+01 : f32
    %149 = vector.broadcast %cst_66 : f32 to vector<8x1xf32>
    %150 = arith.divf %148, %149 : vector<8x1xf32>
    %151 = vector.broadcast %150 : vector<8x1xf32> to vector<8x32xf32>
    %152 = arith.subf %144, %151 : vector<8x32xf32>
    %153 = arith.mulf %152, %152 : vector<8x32xf32>
    %cst_67 = arith.constant dense<0.000000e+00> : vector<8xf32>
    %154 = vector.multi_reduction <add>, %153, %cst_67 [1] : vector<8x32xf32> to vector<8xf32>
    %155 = vector.shape_cast %154 : vector<8xf32> to vector<8x1xf32>
    %cst_68 = arith.constant 3.200000e+01 : f32
    %156 = vector.broadcast %cst_68 : f32 to vector<8x1xf32>
    %157 = arith.divf %155, %156 : vector<8x1xf32>
    %cst_69 = arith.constant 9.99999974E-6 : f32
    %158 = vector.broadcast %cst_69 : f32 to vector<8x1xf32>
    %159 = arith.addf %157, %158 : vector<8x1xf32>
    %160 = math.rsqrt %159 : vector<8x1xf32>
    %161 = vector.broadcast %160 : vector<8x1xf32> to vector<8x32xf32>
    %162 = arith.mulf %152, %161 : vector<8x32xf32>
    %163 = vector.broadcast %145 : vector<1x32xf32> to vector<8x32xf32>
    %164 = arith.mulf %162, %163 : vector<8x32xf32>
    %165 = vector.broadcast %146 : vector<1x32xf32> to vector<8x32xf32>
    %166 = arith.addf %164, %165 : vector<8x32xf32>
    %c0_70 = arith.constant 0 : index
    %c0_71 = arith.constant 0 : index
    %167 = vector.load %arg15[%c0_70, %c0_71] : memref<32x128xf32, #tpu.memory_space<vmem>>, vector<32x128xf32>
    %cst_72 = arith.constant dense<0.000000e+00> : vector<8x128xf32>
    %168 = tpu.matmul %166, %167, %cst_72 {dimension_numbers = #tpu.dot_dimension_numbers<[1], [0], [0], [1], [0, 0, 1, 1], [], []>} : vector<8x32xf32>, vector<32x128xf32>, vector<8x128xf32> -> vector<8x128xf32>
    %c0_73 = arith.constant 0 : index
    %c0_74 = arith.constant 0 : index
    %169 = vector.load %arg16[%c0_73, %c0_74] : memref<1x128xf32, #tpu.memory_space<vmem>>, vector<1x128xf32>
    %170 = vector.broadcast %169 : vector<1x128xf32> to vector<8x128xf32>
    %171 = arith.addf %168, %170 : vector<8x128xf32>
    %cst_75 = arith.constant 5.000000e-01 : f32
    %172 = vector.broadcast %cst_75 : f32 to vector<8x128xf32>
    %173 = arith.mulf %172, %171 : vector<8x128xf32>
    %cst_76 = arith.constant 4.471500e-02 : f32
    %174 = vector.broadcast %cst_76 : f32 to vector<8x128xf32>
    %175 = arith.mulf %174, %171 : vector<8x128xf32>
    %176 = arith.mulf %175, %171 : vector<8x128xf32>
    %177 = arith.mulf %176, %171 : vector<8x128xf32>
    %178 = arith.addf %171, %177 : vector<8x128xf32>
    %cst_77 = arith.constant 0.797884583 : f32
    %179 = vector.broadcast %cst_77 : f32 to vector<8x128xf32>
    %180 = arith.mulf %179, %178 : vector<8x128xf32>
    %181 = math.tanh %180 : vector<8x128xf32>
    %cst_78 = arith.constant 1.000000e+00 : f32
    %182 = vector.broadcast %cst_78 : f32 to vector<8x128xf32>
    %183 = arith.addf %182, %181 : vector<8x128xf32>
    %184 = arith.mulf %173, %183 : vector<8x128xf32>
    %c0_79 = arith.constant 0 : index
    %c0_80 = arith.constant 0 : index
    %185 = vector.load %arg17[%c0_79, %c0_80] : memref<128x32xf32, #tpu.memory_space<vmem>>, vector<128x32xf32>
    %cst_81 = arith.constant dense<0.000000e+00> : vector<8x32xf32>
    %186 = tpu.matmul %184, %185, %cst_81 {dimension_numbers = #tpu.dot_dimension_numbers<[1], [0], [0], [1], [0, 0, 1, 1], [], []>} : vector<8x128xf32>, vector<128x32xf32>, vector<8x32xf32> -> vector<8x32xf32>
    %c0_82 = arith.constant 0 : index
    %c0_83 = arith.constant 0 : index
    %187 = vector.load %arg18[%c0_82, %c0_83] : memref<1x32xf32, #tpu.memory_space<vmem>>, vector<1x32xf32>
    %188 = vector.broadcast %187 : vector<1x32xf32> to vector<8x32xf32>
    %189 = arith.addf %186, %188 : vector<8x32xf32>
    %190 = arith.addf %144, %189 : vector<8x32xf32>
    %c0_84 = arith.constant 0 : index
    %c0_85 = arith.constant 0 : index
    %c0_86 = arith.constant 0 : index
    %191 = vector.load %arg19[%c0_84, %c0_85, %c0_86] : memref<1x8x32xf32, #tpu.memory_space<vmem>>, vector<1x8x32xf32>
    %192 = vector.shape_cast %191 : vector<1x8x32xf32> to vector<8x32xf32>
    %193 = vector.shape_cast %190 : vector<8x32xf32> to vector<1x8x32xf32>
    tpu.vector_store %arg19[%c0_84, %c0_85, %c0_86], %193 {strides = array<i32>} : memref<1x8x32xf32, #tpu.memory_space<vmem>>, vector<1x8x32xf32>,
    return
  }
  func.func @transform_0(%arg0: i32) -> (i32, i32, i32) {
    %c0_i32 = arith.constant 0 : i32
    %c0_i32_0 = arith.constant 0 : i32
    %c0_i32_1 = arith.constant 0 : i32
    return %arg0, %c0_i32, %c0_i32_0 : i32, i32, i32
  }
  func.func @transform_1(%arg0: i32) -> (i32, i32, i32) {
    %c0_i32 = arith.constant 0 : i32
    %c0_i32_0 = arith.constant 0 : i32
    %c0_i32_1 = arith.constant 0 : i32
    return %arg0, %c0_i32, %c0_i32_0 : i32, i32, i32
  }
  func.func @transform_2(%arg0: i32) -> (i32, i32) {
    %c0_i32 = arith.constant 0 : i32
    %c0_i32_0 = arith.constant 0 : i32
    %c0_i32_1 = arith.constant 0 : i32
    return %c0_i32, %c0_i32_0 : i32, i32
  }
  func.func @transform_3(%arg0: i32) -> (i32, i32) {
    %c0_i32 = arith.constant 0 : i32
    %c0_i32_0 = arith.constant 0 : i32
    %c0_i32_1 = arith.constant 0 : i32
    return %c0_i32, %c0_i32_0 : i32, i32
  }
  func.func @transform_4(%arg0: i32) -> (i32, i32) {
    %c0_i32 = arith.constant 0 : i32
    %c0_i32_0 = arith.constant 0 : i32
    %c0_i32_1 = arith.constant 0 : i32
    return %c0_i32, %c0_i32_0 : i32, i32
  }
  func.func @transform_5(%arg0: i32) -> (i32, i32) {
    %c0_i32 = arith.constant 0 : i32
    %c0_i32_0 = arith.constant 0 : i32
    %c0_i32_1 = arith.constant 0 : i32
    return %c0_i32, %c0_i32_0 : i32, i32
  }
  func.func @transform_6(%arg0: i32) -> (i32, i32) {
    %c0_i32 = arith.constant 0 : i32
    %c0_i32_0 = arith.constant 0 : i32
    %c0_i32_1 = arith.constant 0 : i32
    return %c0_i32, %c0_i32_0 : i32, i32
  }
  func.func @transform_7(%arg0: i32) -> (i32, i32) {
    %c0_i32 = arith.constant 0 : i32
    %c0_i32_0 = arith.constant 0 : i32
    %c0_i32_1 = arith.constant 0 : i32
    return %c0_i32, %c0_i32_0 : i32, i32
  }
  func.func @transform_8(%arg0: i32) -> (i32, i32) {
    %c0_i32 = arith.constant 0 : i32
    %c0_i32_0 = arith.constant 0 : i32
    %c0_i32_1 = arith.constant 0 : i32
    return %c0_i32, %c0_i32_0 : i32, i32
  }
  func.func @transform_9(%arg0: i32) -> (i32, i32) {
    %c0_i32 = arith.constant 0 : i32
    %c0_i32_0 = arith.constant 0 : i32
    %c0_i32_1 = arith.constant 0 : i32
    return %c0_i32, %c0_i32_0 : i32, i32
  }
  func.func @transform_10(%arg0: i32) -> (i32, i32) {
    %c0_i32 = arith.constant 0 : i32
    %c0_i32_0 = arith.constant 0 : i32
    %c0_i32_1 = arith.constant 0 : i32
    return %c0_i32, %c0_i32_0 : i32, i32
  }
  func.func @transform_11(%arg0: i32) -> (i32, i32) {
    %c0_i32 = arith.constant 0 : i32
    %c0_i32_0 = arith.constant 0 : i32
    %c0_i32_1 = arith.constant 0 : i32
    return %c0_i32, %c0_i32_0 : i32, i32
  }
  func.func @transform_12(%arg0: i32) -> (i32, i32) {
    %c0_i32 = arith.constant 0 : i32
    %c0_i32_0 = arith.constant 0 : i32
    %c0_i32_1 = arith.constant 0 : i32
    return %c0_i32, %c0_i32_0 : i32, i32
  }
  func.func @transform_13(%arg0: i32) -> (i32, i32) {
    %c0_i32 = arith.constant 0 : i32
    %c0_i32_0 = arith.constant 0 : i32
    %c0_i32_1 = arith.constant 0 : i32
    return %c0_i32, %c0_i32_0 : i32, i32
  }
  func.func @transform_14(%arg0: i32) -> (i32, i32) {
    %c0_i32 = arith.constant 0 : i32
    %c0_i32_0 = arith.constant 0 : i32
    %c0_i32_1 = arith.constant 0 : i32
    return %c0_i32, %c0_i32_0 : i32, i32
  }
  func.func @transform_15(%arg0: i32) -> (i32, i32) {
    %c0_i32 = arith.constant 0 : i32
    %c0_i32_0 = arith.constant 0 : i32
    %c0_i32_1 = arith.constant 0 : i32
    return %c0_i32, %c0_i32_0 : i32, i32
  }
  func.func @transform_16(%arg0: i32) -> (i32, i32) {
    %c0_i32 = arith.constant 0 : i32
    %c0_i32_0 = arith.constant 0 : i32
    %c0_i32_1 = arith.constant 0 : i32
    return %c0_i32, %c0_i32_0 : i32, i32
  }
  func.func @transform_17(%arg0: i32) -> (i32, i32) {
    %c0_i32 = arith.constant 0 : i32
    %c0_i32_0 = arith.constant 0 : i32
    %c0_i32_1 = arith.constant 0 : i32
    return %c0_i32, %c0_i32_0 : i32, i32
  }
  func.func @transform_18(%arg0: i32) -> (i32, i32, i32) {
    %c0_i32 = arith.constant 0 : i32
    %c0_i32_0 = arith.constant 0 : i32
    %c0_i32_1 = arith.constant 0 : i32
    return %arg0, %c0_i32, %c0_i32_0 : i32, i32, i32
  }
}

</mosaic_0001>

<llo_original>
// kernel: tpu_custom_call.1
$region0: #{tpu_custom_call.1}
  #allocation0 [shape = 'u32[]', space=smem, size = 0x4, offset = 0x4, fixed_abs, tag = 'smem constant byte address 0x4 - core index']
  #allocation1 [shape = 'u32[72,128]{1,0:T(1,128)}', space=vmem, size = 0x9000, scoped, tag = 'internal scratch']
  %s0 = inlined_call_operand.hbm [shape: f32[2,8,32], index: 0, kind: input, shape index: {}]
  %s1 = inlined_call_operand.hbm [shape: s32[2,1,8], index: 1, kind: input, shape index: {}]
  %s2 = inlined_call_operand.vmem [shape: f32[1,32], index: 2, kind: input, shape index: {}]
  %s3 = inlined_call_operand.hbm [shape: f32[1,32], index: 3, kind: input, shape index: {}]
  %s4 = inlined_call_operand.vmem [shape: f32[32,32], index: 4, kind: input, shape index: {}]
  %s5 = inlined_call_operand.vmem [shape: f32[1,32], index: 5, kind: input, shape index: {}]
  %s6 = inlined_call_operand.vmem [shape: f32[32,32], index: 6, kind: input, shape index: {}]
  %s7 = inlined_call_operand.vmem [shape: f32[1,32], index: 7, kind: input, shape index: {}]
  %s8 = inlined_call_operand.vmem [shape: f32[32,32], index: 8, kind: input, shape index: {}]
  %s9 = inlined_call_operand.vmem [shape: f32[1,32], index: 9, kind: input, shape index: {}]
  %s10 = inlined_call_operand.vmem [shape: f32[32,32], index: 10, kind: input, shape index: {}]
  %s11 = inlined_call_operand.vmem [shape: f32[1,32], index: 11, kind: input, shape index: {}]
  %s12 = inlined_call_operand.vmem [shape: f32[1,32], index: 12, kind: input, shape index: {}]
  %s13 = inlined_call_operand.vmem [shape: f32[1,32], index: 13, kind: input, shape index: {}]
  %s14 = inlined_call_operand.vmem [shape: f32[32,128], index: 14, kind: input, shape index: {}]
  %s15 = inlined_call_operand.vmem [shape: f32[1,128], index: 15, kind: input, shape index: {}]
  %s16 = inlined_call_operand.vmem [shape: f32[128,32], index: 16, kind: input, shape index: {}]
  %s17 = inlined_call_operand.vmem [shape: f32[1,32], index: 17, kind: input, shape index: {}]
  %s18 = inlined_call_operand.hbm [shape: f32[2,8,32], index: 18, kind: output, shape index: {}]
  %s19 = sld [smem:[#allocation0]]
  $region117: #{tpu_custom_call.1} parent=0
    _
  %s21 = ssub.s32 1, %s19
  %s22 = scalar_select 0, %s21, %s19
  $region1: #{tpu_custom_call.1} parent=0
    #allocation2 [shape = 'u8[8192]{0}', space=vmem, size = 0x2000, scoped, tag = 'input window, operand 0']
    #allocation3 [shape = 's32[2]{0}', space=sflag, size = 0x8, scoped, tag = 'scoped memory for tpu_custom_call.1']
    #allocation4 [shape = 's32[2]{0}', space=sflag, size = 0x8, scoped, tag = 'scoped memory for tpu_custom_call.1']
    #allocation5 [shape = 'u8[1024]{0}', space=vmem, size = 0x400, scoped, tag = 'input window, operand 1']
    #allocation6 [shape = 's32[2]{0}', space=sflag, size = 0x8, scoped, tag = 'scoped memory for tpu_custom_call.1']
    #allocation7 [shape = 'u8[512]{0}', space=vmem, size = 0x400, scoped, tag = 'input window, operand 3, single buffered']
    #allocation8 [shape = 'u8[8192]{0}', space=vmem, size = 0x2000, scoped, tag = 'output window, operand 0']
    %23 = vsyncpa [#allocation3], 0
    %s24 = scalar_lea.sflag [#allocation3], 1
    %25 = vsyncpa %s24, 0
    %26 = vsyncpa [#allocation6], 0
    %s27 = scalar_lea.sflag [#allocation6], 1
    %28 = vsyncpa %s27, 0
    %29 = vsyncpa [#allocation4], 0
    %s30 = scalar_lea.sflag [#allocation4], 1
    %31 = vsyncpa %s30, 0
    loop: start=0, step=1, limit=4
    $region2: #{tpu_custom_call.1} parent=1 // loop_pre_header
      _
    $region3: #{tpu_custom_call.1} parent=1 // loop_header
      %s33 = sphi 0, %s37
      %p34 = scmp.ge.s32.totalorder %s33, 4
      %s43 = sphi 0, %s45
      %s46 = sphi 0, %s43
      %s47 = sphi 0, %s46
      %s63 = sphi 0, %s47
      %s69 = sphi 0, %s71
      %s72 = sphi 0, %s69
      %s73 = sphi 0, %s72
      %s89 = sphi 0, %s73
      %s93 = sphi 0, %s93
      %s95 = sphi 0, %s93
      %s96 = sphi 0, %s95
      %s110 = sphi 0, %s96
      %s114 = sphi 0, %s114
      %s116 = sphi 0, %s114
      %s117 = sphi 0, %s116
      %s131 = sphi 0, %s117
      %s135 = sphi 0, %s135
      %s137 = sphi 0, %s135
      %s138 = sphi 0, %s137
      %s152 = sphi 0, %s138
      %s156 = sphi 0, %s156
      %s158 = sphi 0, %s156
      %s159 = sphi 0, %s158
      %s173 = sphi 0, %s159
      %s177 = sphi 0, %s177
      %s179 = sphi 0, %s177
      %s180 = sphi 0, %s179
      %s194 = sphi 0, %s180
      %s198 = sphi 0, %s198
      %s200 = sphi 0, %s198
      %s201 = sphi 0, %s200
      %s215 = sphi 0, %s201
      %s219 = sphi 0, %s219
      %s221 = sphi 0, %s219
      %s222 = sphi 0, %s221
      %s236 = sphi 0, %s222
      %s240 = sphi 0, %s240
      %s242 = sphi 0, %s240
      %s243 = sphi 0, %s242
      %s257 = sphi 0, %s243
      %s261 = sphi 0, %s261
      %s263 = sphi 0, %s261
      %s264 = sphi 0, %s263
      %s278 = sphi 0, %s264
      %s282 = sphi 0, %s282
      %s284 = sphi 0, %s282
      %s285 = sphi 0, %s284
      %s299 = sphi 0, %s285
      %s303 = sphi 0, %s303
      %s305 = sphi 0, %s303
      %s306 = sphi 0, %s305
      %s320 = sphi 0, %s306
      %s324 = sphi 0, %s324
      %s326 = sphi 0, %s324
      %s327 = sphi 0, %s326
      %s341 = sphi 0, %s327
      %s345 = sphi 0, %s345
      %s347 = sphi 0, %s345
      %s348 = sphi 0, %s347
      %s362 = sphi 0, %s348
      %s366 = sphi 0, %s366
      %s368 = sphi 0, %s366
      %s369 = sphi 0, %s368
      %s383 = sphi 0, %s369
      %s387 = sphi 0, %s387
      %s389 = sphi 0, %s387
      %s390 = sphi 0, %s389
      %s404 = sphi 0, %s390
      %s408 = sphi 0, %s408
      %s410 = sphi 0, %s408
      %s411 = sphi 0, %s410
      %s425 = sphi 0, %s411
      %s431 = sphi 0, %s433
      %s434 = sphi 0, %s431
      %s435 = sphi 0, %s434
      %s451 = sphi 0, %s435
    $region4: #{tpu_custom_call.1} parent=1 // loop_header_branch
      %36 = sbr.rel (%p34) target = $region8
    $region5: #{tpu_custom_call.1} parent=1 // loop_body
      %s38 = ssub.s32 %s33, 1
      %s39 = ssub.s32 %s33, 2
      %s40 = sadd.s32 %s33, 1
      %s41 = ssub.s32 %s33, %s40
      %p42 = scmp.eq.s32.totalorder %s41, 0
      %s44 = sadd.s32 %s43, 1
      %s45 = scalar_select %p42, %s43, %s44
      %p48 = pneg %p42
      %p49 = scmp.eq.s32.totalorder %s33, 1
      %p50 = por %p48, %p49
      %p51 = scmp.ne.s32.totalorder %s43, %s46
      %p52 = scmp.eq.s32.totalorder %s33, 0
      %p53 = por %p51, %p52
      %p54 = scmp.ne.s32.totalorder %s43, %s46
      %p55 = scmp.eq.s32.totalorder %s38, 1
      %p56 = por %p54, %p55
      %p57 = scmp.ne.s32.totalorder %s46, %s47
      %p58 = scmp.eq.s32.totalorder %s38, 0
      %p59 = por %p57, %p58
      %p60 = scmp.ne.s32.totalorder %s46, %s47
      %p61 = scmp.eq.s32.totalorder %s39, 1
      %p62 = por %p60, %p61
      %p64 = scmp.ne.s32.totalorder %s47, %s63
      %p65 = scmp.eq.s32.totalorder %s39, 0
      %p66 = por %p64, %p65
      %s67 = ssub.s32 %s33, %s40
      %p68 = scmp.eq.s32.totalorder %s67, 0
      %s70 = sadd.s32 %s69, 1
      %s71 = scalar_select %p68, %s69, %s70
      %p74 = pneg %p68
      %p75 = scmp.eq.s32.totalorder %s33, 1
      %p76 = por %p74, %p75
      %p77 = scmp.ne.s32.totalorder %s69, %s72
      %p78 = scmp.eq.s32.totalorder %s33, 0
      %p79 = por %p77, %p78
      %p80 = scmp.ne.s32.totalorder %s69, %s72
      %p81 = scmp.eq.s32.totalorder %s38, 1
      %p82 = por %p80, %p81
      %p83 = scmp.ne.s32.totalorder %s72, %s73
      %p84 = scmp.eq.s32.totalorder %s38, 0
      %p85 = por %p83, %p84
      %p86 = scmp.ne.s32.totalorder %s72, %s73
      %p87 = scmp.eq.s32.totalorder %s39, 1
      %p88 = por %p86, %p87
      %p90 = scmp.ne.s32.totalorder %s73, %s89
      %p91 = scmp.eq.s32.totalorder %s39, 0
      %p92 = por %p90, %p91
      %s94 = sadd.s32 %s93, 1
      %p97 = scmp.eq.s32.totalorder %s33, 1
      %p98 = scmp.ne.s32.totalorder %s93, %s95
      %p99 = scmp.eq.s32.totalorder %s33, 0
      %p100 = por %p98, %p99
      %p101 = scmp.ne.s32.totalorder %s93, %s95
      %p102 = scmp.eq.s32.totalorder %s38, 1
      %p103 = por %p101, %p102
      %p104 = scmp.ne.s32.totalorder %s95, %s96
      %p105 = scmp.eq.s32.totalorder %s38, 0
      %p106 = por %p104, %p105
      %p107 = scmp.ne.s32.totalorder %s95, %s96
      %p108 = scmp.eq.s32.totalorder %s39, 1
      %p109 = por %p107, %p108
      %p111 = scmp.ne.s32.totalorder %s96, %s110
      %p112 = scmp.eq.s32.totalorder %s39, 0
      %p113 = por %p111, %p112
      %s115 = sadd.s32 %s114, 1
      %p118 = scmp.eq.s32.totalorder %s33, 1
      %p119 = scmp.ne.s32.totalorder %s114, %s116
      %p120 = scmp.eq.s32.totalorder %s33, 0
      %p121 = por %p119, %p120
      %p122 = scmp.ne.s32.totalorder %s114, %s116
      %p123 = scmp.eq.s32.totalorder %s38, 1
      %p124 = por %p122, %p123
      %p125 = scmp.ne.s32.totalorder %s116, %s117
      %p126 = scmp.eq.s32.totalorder %s38, 0
      %p127 = por %p125, %p126
      %p128 = scmp.ne.s32.totalorder %s116, %s117
      %p129 = scmp.eq.s32.totalorder %s39, 1
      %p130 = por %p128, %p129
      %p132 = scmp.ne.s32.totalorder %s117, %s131
      %p133 = scmp.eq.s32.totalorder %s39, 0
      %p134 = por %p132, %p133
      %s136 = sadd.s32 %s135, 1
      %p139 = scmp.eq.s32.totalorder %s33, 1
      %p140 = scmp.ne.s32.totalorder %s135, %s137
      %p141 = scmp.eq.s32.totalorder %s33, 0
      %p142 = por %p140, %p141
      %p143 = scmp.ne.s32.totalorder %s135, %s137
      %p144 = scmp.eq.s32.totalorder %s38, 1
      %p145 = por %p143, %p144
      %p146 = scmp.ne.s32.totalorder %s137, %s138
      %p147 = scmp.eq.s32.totalorder %s38, 0
      %p148 = por %p146, %p147
      %p149 = scmp.ne.s32.totalorder %s137, %s138
      %p150 = scmp.eq.s32.totalorder %s39, 1
      %p151 = por %p149, %p150
      %p153 = scmp.ne.s32.totalorder %s138, %s152
      %p154 = scmp.eq.s32.totalorder %s39, 0
      %p155 = por %p153, %p154
      %s157 = sadd.s32 %s156, 1
      %p160 = scmp.eq.s32.totalorder %s33, 1
      %p161 = scmp.ne.s32.totalorder %s156, %s158
      %p162 = scmp.eq.s32.totalorder %s33, 0
      %p163 = por %p161, %p162
      %p164 = scmp.ne.s32.totalorder %s156, %s158
      %p165 = scmp.eq.s32.totalorder %s38, 1
      %p166 = por %p164, %p165
      %p167 = scmp.ne.s32.totalorder %s158, %s159
      %p168 = scmp.eq.s32.totalorder %s38, 0
      %p169 = por %p167, %p168
      %p170 = scmp.ne.s32.totalorder %s158, %s159
      %p171 = scmp.eq.s32.totalorder %s39, 1
      %p172 = por %p170, %p171
      %p174 = scmp.ne.s32.totalorder %s159, %s173
      %p175 = scmp.eq.s32.totalorder %s39, 0
      %p176 = por %p174, %p175
      %s178 = sadd.s32 %s177, 1
      %p181 = scmp.eq.s32.totalorder %s33, 1
      %p182 = scmp.ne.s32.totalorder %s177, %s179
      %p183 = scmp.eq.s32.totalorder %s33, 0
      %p184 = por %p182, %p183
      %p185 = scmp.ne.s32.totalorder %s177, %s179
      %p186 = scmp.eq.s32.totalorder %s38, 1
      %p187 = por %p185, %p186
      %p188 = scmp.ne.s32.totalorder %s179, %s180
      %p189 = scmp.eq.s32.totalorder %s38, 0
      %p190 = por %p188, %p189
      %p191 = scmp.ne.s32.totalorder %s179, %s180
      %p192 = scmp.eq.s32.totalorder %s39, 1
      %p193 = por %p191, %p192
      %p195 = scmp.ne.s32.totalorder %s180, %s194
      %p196 = scmp.eq.s32.totalorder %s39, 0
      %p197 = por %p195, %p196
      %s199 = sadd.s32 %s198, 1
      %p202 = scmp.eq.s32.totalorder %s33, 1
      %p203 = scmp.ne.s32.totalorder %s198, %s200
      %p204 = scmp.eq.s32.totalorder %s33, 0
      %p205 = por %p203, %p204
      %p206 = scmp.ne.s32.totalorder %s198, %s200
      %p207 = scmp.eq.s32.totalorder %s38, 1
      %p208 = por %p206, %p207
      %p209 = scmp.ne.s32.totalorder %s200, %s201
      %p210 = scmp.eq.s32.totalorder %s38, 0
      %p211 = por %p209, %p210
      %p212 = scmp.ne.s32.totalorder %s200, %s201
      %p213 = scmp.eq.s32.totalorder %s39, 1
      %p214 = por %p212, %p213
      %p216 = scmp.ne.s32.totalorder %s201, %s215
      %p217 = scmp.eq.s32.totalorder %s39, 0
      %p218 = por %p216, %p217
      %s220 = sadd.s32 %s219, 1
      %p223 = scmp.eq.s32.totalorder %s33, 1
      %p224 = scmp.ne.s32.totalorder %s219, %s221
      %p225 = scmp.eq.s32.totalorder %s33, 0
      %p226 = por %p224, %p225
      %p227 = scmp.ne.s32.totalorder %s219, %s221
      %p228 = scmp.eq.s32.totalorder %s38, 1
      %p229 = por %p227, %p228
      %p230 = scmp.ne.s32.totalorder %s221, %s222
      %p231 = scmp.eq.s32.totalorder %s38, 0
      %p232 = por %p230, %p231
      %p233 = scmp.ne.s32.totalorder %s221, %s222
      %p234 = scmp.eq.s32.totalorder %s39, 1
      %p235 = por %p233, %p234
      %p237 = scmp.ne.s32.totalorder %s222, %s236
      %p238 = scmp.eq.s32.totalorder %s39, 0
      %p239 = por %p237, %p238
      %s241 = sadd.s32 %s240, 1
      %p244 = scmp.eq.s32.totalorder %s33, 1
      %p245 = scmp.ne.s32.totalorder %s240, %s242
      %p246 = scmp.eq.s32.totalorder %s33, 0
      %p247 = por %p245, %p246
      %p248 = scmp.ne.s32.totalorder %s240, %s242
      %p249 = scmp.eq.s32.totalorder %s38, 1
      %p250 = por %p248, %p249
      %p251 = scmp.ne.s32.totalorder %s242, %s243
      %p252 = scmp.eq.s32.totalorder %s38, 0
      %p253 = por %p251, %p252
      %p254 = scmp.ne.s32.totalorder %s242, %s243
      %p255 = scmp.eq.s32.totalorder %s39, 1
      %p256 = por %p254, %p255
      %p258 = scmp.ne.s32.totalorder %s243, %s257
      %p259 = scmp.eq.s32.totalorder %s39, 0
      %p260 = por %p258, %p259
      %s262 = sadd.s32 %s261, 1
      %p265 = scmp.eq.s32.totalorder %s33, 1
      %p266 = scmp.ne.s32.totalorder %s261, %s263
      %p267 = scmp.eq.s32.totalorder %s33, 0
      %p268 = por %p266, %p267
      %p269 = scmp.ne.s32.totalorder %s261, %s263
      %p270 = scmp.eq.s32.totalorder %s38, 1
      %p271 = por %p269, %p270
      %p272 = scmp.ne.s32.totalorder %s263, %s264
      %p273 = scmp.eq.s32.totalorder %s38, 0
      %p274 = por %p272, %p273
      %p275 = scmp.ne.s32.totalorder %s263, %s264
      %p276 = scmp.eq.s32.totalorder %s39, 1
      %p277 = por %p275, %p276
      %p279 = scmp.ne.s32.totalorder %s264, %s278
      %p280 = scmp.eq.s32.totalorder %s39, 0
      %p281 = por %p279, %p280
      %s283 = sadd.s32 %s282, 1
      %p286 = scmp.eq.s32.totalorder %s33, 1
      %p287 = scmp.ne.s32.totalorder %s282, %s284
      %p288 = scmp.eq.s32.totalorder %s33, 0
      %p289 = por %p287, %p288
      %p290 = scmp.ne.s32.totalorder %s282, %s284
      %p291 = scmp.eq.s32.totalorder %s38, 1
      %p292 = por %p290, %p291
      %p293 = scmp.ne.s32.totalorder %s284, %s285
      %p294 = scmp.eq.s32.totalorder %s38, 0
      %p295 = por %p293, %p294
      %p296 = scmp.ne.s32.totalorder %s284, %s285
      %p297 = scmp.eq.s32.totalorder %s39, 1
      %p298 = por %p296, %p297
      %p300 = scmp.ne.s32.totalorder %s285, %s299
      %p301 = scmp.eq.s32.totalorder %s39, 0
      %p302 = por %p300, %p301
      %s304 = sadd.s32 %s303, 1
      %p307 = scmp.eq.s32.totalorder %s33, 1
      %p308 = scmp.ne.s32.totalorder %s303, %s305
      %p309 = scmp.eq.s32.totalorder %s33, 0
      %p310 = por %p308, %p309
      %p311 = scmp.ne.s32.totalorder %s303, %s305
      %p312 = scmp.eq.s32.totalorder %s38, 1
      %p313 = por %p311, %p312
      %p314 = scmp.ne.s32.totalorder %s305, %s306
      %p315 = scmp.eq.s32.totalorder %s38, 0
      %p316 = por %p314, %p315
      %p317 = scmp.ne.s32.totalorder %s305, %s306
      %p318 = scmp.eq.s32.totalorder %s39, 1
      %p319 = por %p317, %p318
      %p321 = scmp.ne.s32.totalorder %s306, %s320
      %p322 = scmp.eq.s32.totalorder %s39, 0
      %p323 = por %p321, %p322
      %s325 = sadd.s32 %s324, 1
      %p328 = scmp.eq.s32.totalorder %s33, 1
      %p329 = scmp.ne.s32.totalorder %s324, %s326
      %p330 = scmp.eq.s32.totalorder %s33, 0
      %p331 = por %p329, %p330
      %p332 = scmp.ne.s32.totalorder %s324, %s326
      %p333 = scmp.eq.s32.totalorder %s38, 1
      %p334 = por %p332, %p333
      %p335 = scmp.ne.s32.totalorder %s326, %s327
      %p336 = scmp.eq.s32.totalorder %s38, 0
      %p337 = por %p335, %p336
      %p338 = scmp.ne.s32.totalorder %s326, %s327
      %p339 = scmp.eq.s32.totalorder %s39, 1
      %p340 = por %p338, %p339
      %p342 = scmp.ne.s32.totalorder %s327, %s341
      %p343 = scmp.eq.s32.totalorder %s39, 0
      %p344 = por %p342, %p343
      %s346 = sadd.s32 %s345, 1
      %p349 = scmp.eq.s32.totalorder %s33, 1
      %p350 = scmp.ne.s32.totalorder %s345, %s347
      %p351 = scmp.eq.s32.totalorder %s33, 0
      %p352 = por %p350, %p351
      %p353 = scmp.ne.s32.totalorder %s345, %s347
      %p354 = scmp.eq.s32.totalorder %s38, 1
      %p355 = por %p353, %p354
      %p356 = scmp.ne.s32.totalorder %s347, %s348
      %p357 = scmp.eq.s32.totalorder %s38, 0
      %p358 = por %p356, %p357
      %p359 = scmp.ne.s32.totalorder %s347, %s348
      %p360 = scmp.eq.s32.totalorder %s39, 1
      %p361 = por %p359, %p360
      %p363 = scmp.ne.s32.totalorder %s348, %s362
      %p364 = scmp.eq.s32.totalorder %s39, 0
      %p365 = por %p363, %p364
      %s367 = sadd.s32 %s366, 1
      %p370 = scmp.eq.s32.totalorder %s33, 1
      %p371 = scmp.ne.s32.totalorder %s366, %s368
      %p372 = scmp.eq.s32.totalorder %s33, 0
      %p373 = por %p371, %p372
      %p374 = scmp.ne.s32.totalorder %s366, %s368
      %p375 = scmp.eq.s32.totalorder %s38, 1
      %p376 = por %p374, %p375
      %p377 = scmp.ne.s32.totalorder %s368, %s369
      %p378 = scmp.eq.s32.totalorder %s38, 0
      %p379 = por %p377, %p378
      %p380 = scmp.ne.s32.totalorder %s368, %s369
      %p381 = scmp.eq.s32.totalorder %s39, 1
      %p382 = por %p380, %p381
      %p384 = scmp.ne.s32.totalorder %s369, %s383
      %p385 = scmp.eq.s32.totalorder %s39, 0
      %p386 = por %p384, %p385
      %s388 = sadd.s32 %s387, 1
      %p391 = scmp.eq.s32.totalorder %s33, 1
      %p392 = scmp.ne.s32.totalorder %s387, %s389
      %p393 = scmp.eq.s32.totalorder %s33, 0
      %p394 = por %p392, %p393
      %p395 = scmp.ne.s32.totalorder %s387, %s389
      %p396 = scmp.eq.s32.totalorder %s38, 1
      %p397 = por %p395, %p396
      %p398 = scmp.ne.s32.totalorder %s389, %s390
      %p399 = scmp.eq.s32.totalorder %s38, 0
      %p400 = por %p398, %p399
      %p401 = scmp.ne.s32.totalorder %s389, %s390
      %p402 = scmp.eq.s32.totalorder %s39, 1
      %p403 = por %p401, %p402
      %p405 = scmp.ne.s32.totalorder %s390, %s404
      %p406 = scmp.eq.s32.totalorder %s39, 0
      %p407 = por %p405, %p406
      %s409 = sadd.s32 %s408, 1
      %p412 = scmp.eq.s32.totalorder %s33, 1
      %p413 = scmp.ne.s32.totalorder %s408, %s410
      %p414 = scmp.eq.s32.totalorder %s33, 0
      %p415 = por %p413, %p414
      %p416 = scmp.ne.s32.totalorder %s408, %s410
      %p417 = scmp.eq.s32.totalorder %s38, 1
      %p418 = por %p416, %p417
      %p419 = scmp.ne.s32.totalorder %s410, %s411
      %p420 = scmp.eq.s32.totalorder %s38, 0
      %p421 = por %p419, %p420
      %p422 = scmp.ne.s32.totalorder %s410, %s411
      %p423 = scmp.eq.s32.totalorder %s39, 1
      %p424 = por %p422, %p423
      %p426 = scmp.ne.s32.totalorder %s411, %s425
      %p427 = scmp.eq.s32.totalorder %s39, 0
      %p428 = por %p426, %p427
      %s429 = ssub.s32 %s33, %s40
      %p430 = scmp.eq.s32.totalorder %s429, 0
      %s432 = sadd.s32 %s431, 1
      %s433 = scalar_select %p430, %s431, %s432
      %p436 = pneg %p430
      %p437 = scmp.eq.s32.totalorder %s33, 1
      %p438 = por %p436, %p437
      %p439 = scmp.ne.s32.totalorder %s431, %s434
      %p440 = scmp.eq.s32.totalorder %s33, 0
      %p441 = por %p439, %p440
      %p442 = scmp.ne.s32.totalorder %s431, %s434
      %p443 = scmp.eq.s32.totalorder %s38, 1
      %p444 = por %p442, %p443
      %p445 = scmp.ne.s32.totalorder %s434, %s435
      %p446 = scmp.eq.s32.totalorder %s38, 0
      %p447 = por %p445, %p446
      %p448 = scmp.ne.s32.totalorder %s434, %s435
      %p449 = scmp.eq.s32.totalorder %s39, 1
      %p450 = por %p448, %p449
      %p452 = scmp.ne.s32.totalorder %s435, %s451
      %p453 = scmp.eq.s32.totalorder %s39, 0
      %p454 = por %p452, %p453
      %p455 = scmp.le.s32.totalorder 1, %s33
      %p456 = scmp.lt.s32.totalorder %s33, 3
      %p457 = pnand %p455, %p456
      %p458 = pneg %p457
      // Predicated region
      $region9: #{tpu_custom_call.1} parent=5 // pred_check
        _
      $region10: #{tpu_custom_call.1} parent=5 // pred_check_branch
        %460 = sbr.rel (%p457) target = $region12
      $region11: #{tpu_custom_call.1} parent=5 // pred_region
        %s461 = ssub.s32 %s33, 1
        // Predicated region
        $region13: #{tpu_custom_call.1} parent=11 // pred_check
          %p462 = pneg %p106
        $region14: #{tpu_custom_call.1} parent=11 // pred_check_branch
          %464 = sbr.rel (%p462) target = $region16
        $region15: #{tpu_custom_call.1} parent=11 // pred_region
          _
        $region16: #{tpu_custom_call.1} parent=11 // pred_fallthru
          _
        // Predicated region
        $region17: #{tpu_custom_call.1} parent=11 // pred_check
          %p465 = pneg %p127
        $region18: #{tpu_custom_call.1} parent=11 // pred_check_branch
          %467 = sbr.rel (%p465) target = $region20
        $region19: #{tpu_custom_call.1} parent=11 // pred_region
          %469 = vsyncadd [#allocation6], 0
          %s471 = sshll.u32 %s3, 4
          %s472 = int_to_ptr.hbm [resolvable:$true] %s471
          %s473 = sshll.u32 [#allocation7], 4
          %s474 = int_to_ptr.vmem [resolvable:$true] %s473
          %476 = dma.hbm_to_vmem [thread:$0]  %s472, 16, %s474, [#allocation6]
        $region20: #{tpu_custom_call.1} parent=11 // pred_fallthru
          _
        // Predicated region
        $region21: #{tpu_custom_call.1} parent=11 // pred_check
          %p477 = pneg %p148
        $region22: #{tpu_custom_call.1} parent=11 // pred_check_branch
          %479 = sbr.rel (%p477) target = $region24
        $region23: #{tpu_custom_call.1} parent=11 // pred_region
          _
        $region24: #{tpu_custom_call.1} parent=11 // pred_fallthru
          _
        // Predicated region
        $region25: #{tpu_custom_call.1} parent=11 // pred_check
          %p480 = pneg %p169
        $region26: #{tpu_custom_call.1} parent=11 // pred_check_branch
          %482 = sbr.rel (%p480) target = $region28
        $region27: #{tpu_custom_call.1} parent=11 // pred_region
          _
        $region28: #{tpu_custom_call.1} parent=11 // pred_fallthru
          _
        // Predicated region
        $region29: #{tpu_custom_call.1} parent=11 // pred_check
          %p483 = pneg %p190
        $region30: #{tpu_custom_call.1} parent=11 // pred_check_branch
          %485 = sbr.rel (%p483) target = $region32
        $region31: #{tpu_custom_call.1} parent=11 // pred_region
          _
        $region32: #{tpu_custom_call.1} parent=11 // pred_fallthru
          _
        // Predicated region
        $region33: #{tpu_custom_call.1} parent=11 // pred_check
          %p486 = pneg %p211
        $region34: #{tpu_custom_call.1} parent=11 // pred_check_branch
          %488 = sbr.rel (%p486) target = $region36
        $region35: #{tpu_custom_call.1} parent=11 // pred_region
          _
        $region36: #{tpu_custom_call.1} parent=11 // pred_fallthru
          _
        // Predicated region
        $region37: #{tpu_custom_call.1} parent=11 // pred_check
          %p489 = pneg %p232
        $region38: #{tpu_custom_call.1} parent=11 // pred_check_branch
          %491 = sbr.rel (%p489) target = $region40
        $region39: #{tpu_custom_call.1} parent=11 // pred_region
          _
        $region40: #{tpu_custom_call.1} parent=11 // pred_fallthru
          _
        // Predicated region
        $region41: #{tpu_custom_call.1} parent=11 // pred_check
          %p492 = pneg %p253
        $region42: #{tpu_custom_call.1} parent=11 // pred_check_branch
          %494 = sbr.rel (%p492) target = $region44
        $region43: #{tpu_custom_call.1} parent=11 // pred_region
          _
        $region44: #{tpu_custom_call.1} parent=11 // pred_fallthru
          _
        // Predicated region
        $region45: #{tpu_custom_call.1} parent=11 // pred_check
          %p495 = pneg %p274
        $region46: #{tpu_custom_call.1} parent=11 // pred_check_branch
          %497 = sbr.rel (%p495) target = $region48
        $region47: #{tpu_custom_call.1} parent=11 // pred_region
          _
        $region48: #{tpu_custom_call.1} parent=11 // pred_fallthru
          _
        // Predicated region
        $region49: #{tpu_custom_call.1} parent=11 // pred_check
          %p498 = pneg %p295
        $region50: #{tpu_custom_call.1} parent=11 // pred_check_branch
          %500 = sbr.rel (%p498) target = $region52
        $region51: #{tpu_custom_call.1} parent=11 // pred_region
          _
        $region52: #{tpu_custom_call.1} parent=11 // pred_fallthru
          _
        // Predicated region
        $region53: #{tpu_custom_call.1} parent=11 // pred_check
          %p501 = pneg %p316
        $region54: #{tpu_custom_call.1} parent=11 // pred_check_branch
          %503 = sbr.rel (%p501) target = $region56
        $region55: #{tpu_custom_call.1} parent=11 // pred_region
          _
        $region56: #{tpu_custom_call.1} parent=11 // pred_fallthru
          _
        // Predicated region
        $region57: #{tpu_custom_call.1} parent=11 // pred_check
          %p504 = pneg %p337
        $region58: #{tpu_custom_call.1} parent=11 // pred_check_branch
          %506 = sbr.rel (%p504) target = $region60
        $region59: #{tpu_custom_call.1} parent=11 // pred_region
          _
        $region60: #{tpu_custom_call.1} parent=11 // pred_fallthru
          _
        // Predicated region
        $region61: #{tpu_custom_call.1} parent=11 // pred_check
          %p507 = pneg %p358
        $region62: #{tpu_custom_call.1} parent=11 // pred_check_branch
          %509 = sbr.rel (%p507) target = $region64
        $region63: #{tpu_custom_call.1} parent=11 // pred_region
          _
        $region64: #{tpu_custom_call.1} parent=11 // pred_fallthru
          _
        // Predicated region
        $region65: #{tpu_custom_call.1} parent=11 // pred_check
          %p510 = pneg %p379
        $region66: #{tpu_custom_call.1} parent=11 // pred_check_branch
          %512 = sbr.rel (%p510) target = $region68
        $region67: #{tpu_custom_call.1} parent=11 // pred_region
          _
        $region68: #{tpu_custom_call.1} parent=11 // pred_fallthru
          _
        // Predicated region
        $region69: #{tpu_custom_call.1} parent=11 // pred_check
          %p513 = pneg %p400
        $region70: #{tpu_custom_call.1} parent=11 // pred_check_branch
          %515 = sbr.rel (%p513) target = $region72
        $region71: #{tpu_custom_call.1} parent=11 // pred_region
          _
        $region72: #{tpu_custom_call.1} parent=11 // pred_fallthru
          _
        // Predicated region
        $region73: #{tpu_custom_call.1} parent=11 // pred_check
          %p516 = pneg %p421
        $region74: #{tpu_custom_call.1} parent=11 // pred_check_branch
          %518 = sbr.rel (%p516) target = $region76
        $region75: #{tpu_custom_call.1} parent=11 // pred_region
          _
        $region76: #{tpu_custom_call.1} parent=11 // pred_fallthru
          _
      $region12: #{tpu_custom_call.1} parent=5 // pred_fallthru
        _
      %p519 = scmp.lt.s32.totalorder %s33, 2
      // Predicated region
      $region77: #{tpu_custom_call.1} parent=5 // pred_check
        %p520 = pneg %p519
      $region78: #{tpu_custom_call.1} parent=5 // pred_check_branch
        %522 = sbr.rel (%p520) target = $region80
      $region79: #{tpu_custom_call.1} parent=5 // pred_region
        // Predicated region
        $region81: #{tpu_custom_call.1} parent=79 // pred_check
          %p523 = pneg %p53
        $region82: #{tpu_custom_call.1} parent=79 // pred_check_branch
          %525 = sbr.rel (%p523) target = $region84
        $region83: #{tpu_custom_call.1} parent=79 // pred_region
          %s526 = sand.u32 %s43, 1
          %s527 = scalar_lea.sflag [#allocation3], %s526
          %s528 = sand.u32 %s43, 1
          %s529 = smul.addr %s528, 8
          %s530 = scalar_lea.vmem [#allocation2], %s529
          %532 = vsyncadd %s527, 0
          %s533 = smul.addr %s33, 8
          %s534 = scalar_lea.hbm %s0, %s533
          %s536 = sshll.u32 %s534, 4
          %s537 = int_to_ptr.hbm [resolvable:$true] %s536
          %s538 = sshll.u32 %s530, 4
          %s539 = int_to_ptr.vmem [resolvable:$true] %s538
          %541 = dma.hbm_to_vmem [thread:$0]  %s537, 128, %s539, %s527
        $region84: #{tpu_custom_call.1} parent=79 // pred_fallthru
          _
        // Predicated region
        $region85: #{tpu_custom_call.1} parent=79 // pred_check
          %p542 = pneg %p79
        $region86: #{tpu_custom_call.1} parent=79 // pred_check_branch
          %544 = sbr.rel (%p542) target = $region88
        $region87: #{tpu_custom_call.1} parent=79 // pred_region
          %s545 = sand.u32 %s33, 1
          %s546 = scalar_lea.sflag [#allocation6], %s545
          %s547 = sand.u32 %s69, 1
          %s548 = scalar_lea.vmem [#allocation5], %s547
          %550 = vsyncadd %s546, 0
          %s551 = scalar_lea.hbm %s1, %s33
          %s553 = sshll.u32 %s551, 4
          %s554 = int_to_ptr.hbm [resolvable:$true] %s553
          %s555 = sshll.u32 %s548, 4
          %s556 = int_to_ptr.vmem [resolvable:$true] %s555
          %558 = dma.hbm_to_vmem [thread:$0]  %s554, 16, %s556, %s546
        $region88: #{tpu_custom_call.1} parent=79 // pred_fallthru
          _
      $region80: #{tpu_custom_call.1} parent=5 // pred_fallthru
        _
      %p559 = scmp.le.s32.totalorder 1, %s33
      %p560 = scmp.lt.s32.totalorder %s33, 3
      %p561 = pnand %p559, %p560
      %p562 = pneg %p561
      // Predicated region
      $region89: #{tpu_custom_call.1} parent=5 // pred_check
        _
      $region90: #{tpu_custom_call.1} parent=5 // pred_check_branch
        %564 = sbr.rel (%p561) target = $region92
      $region91: #{tpu_custom_call.1} parent=5 // pred_region
        %s565 = ssub.s32 %s33, 1
        %s566 = sand.u32 %s46, 1
        %s567 = scalar_lea.sflag [#allocation3], %s566
        %s568 = sand.u32 %s46, 1
        %s569 = smul.addr %s568, 8
        %s570 = scalar_lea.vmem [#allocation2], %s569
        // Predicated region
        $region93: #{tpu_custom_call.1} parent=91 // pred_check
          %p571 = pneg %p59
        $region94: #{tpu_custom_call.1} parent=91 // pred_check_branch
          %573 = sbr.rel (%p571) target = $region96
        $region95: #{tpu_custom_call.1} parent=91 // pred_region
          %575 = dma.done %s567, 128
        $region96: #{tpu_custom_call.1} parent=91 // pred_fallthru
          _
        %s576 = sand.u32 %s38, 1
        %s577 = scalar_lea.sflag [#allocation6], %s576
        %s578 = sand.u32 %s72, 1
        %s579 = scalar_lea.vmem [#allocation5], %s578
        // Predicated region
        $region97: #{tpu_custom_call.1} parent=91 // pred_check
          %p580 = pneg %p85
        $region98: #{tpu_custom_call.1} parent=91 // pred_check_branch
          %582 = sbr.rel (%p580) target = $region100
        $region99: #{tpu_custom_call.1} parent=91 // pred_region
          %584 = dma.done %s577, 16
        $region100: #{tpu_custom_call.1} parent=91 // pred_fallthru
          _
        // Predicated region
        $region101: #{tpu_custom_call.1} parent=91 // pred_check
          %p585 = pneg %p127
        $region102: #{tpu_custom_call.1} parent=91 // pred_check_branch
          %587 = sbr.rel (%p585) target = $region104
        $region103: #{tpu_custom_call.1} parent=91 // pred_region
          %589 = dma.done [#allocation6], 16
        $region104: #{tpu_custom_call.1} parent=91 // pred_fallthru
          _
        %s590 = sand.u32 %s46, 1
        %s591 = scalar_lea.sflag [#allocation3], %s590
        %s592 = sand.u32 %s46, 1
        %s593 = smul.addr %s592, 8
        %s594 = scalar_lea.vmem [#allocation2], %s593
        %p595 = pneg %p59
        %p596 = pneg %p56
        %s597 = sand.u32 %s38, 1
        %s598 = scalar_lea.sflag [#allocation6], %s597
        %s599 = sand.u32 %s72, 1
        %s600 = scalar_lea.vmem [#allocation5], %s599
        %p601 = pneg %p85
        %p602 = pneg %p82
        %p603 = pneg %p106
        %p604 = pneg %p103
        %p605 = pneg %p127
        %p606 = pneg %p124
        %p607 = pneg %p148
        %p608 = pneg %p145
        %p609 = pneg %p169
        %p610 = pneg %p166
        %p611 = pneg %p190
        %p612 = pneg %p187
        %p613 = pneg %p211
        %p614 = pneg %p208
        %p615 = pneg %p232
        %p616 = pneg %p229
        %p617 = pneg %p253
        %p618 = pneg %p250
        %p619 = pneg %p274
        %p620 = pneg %p271
        %p621 = pneg %p295
        %p622 = pneg %p292
        %p623 = pneg %p316
        %p624 = pneg %p313
        %p625 = pneg %p337
        %p626 = pneg %p334
        %p627 = pneg %p358
        %p628 = pneg %p355
        %p629 = pneg %p379
        %p630 = pneg %p376
        %p631 = pneg %p400
        %p632 = pneg %p397
        %p633 = pneg %p421
        %p634 = pneg %p418
        %p635 = pneg %p447
        %p636 = pneg %p444
        %s637 = sand.u32 %s434, 1
        %s638 = scalar_lea.sflag [#allocation4], %s637
        %s639 = sand.u32 %s434, 1
        %s640 = smul.addr %s639, 8
        %s641 = scalar_lea.vmem [#allocation8], %s640
        %v642 = vld [vmem:[%s570] sm:$0xff]
        %v643 = vld [vmem:[%s2] sm:$0x1]
        %v644 = vld [vmem:[#allocation7] sm:$0x1]
        %vm645 = vcmask 261120
        %v646 = vsel %vm645, %v642, 0.0
        %647 = vadd.xlane.f32.xlu0 %v646
        %v648 = vpop.xlane.xlu0 %647
        %v649 = vrcp.pop 32.0
        %v650 = vmul.f32 32.0, %v649
        %v651 = vsub.f32 1.0, %v650
        %v652 = vmul.f32 %v649, %v651
        %v653 = vadd.f32 %v649, %v652
        %vm654 = vweird.f32 %v649
        %v655 = vsel %vm654, %v649, %v653
        %v656 = vmul.f32 %v648, %v655
        %v657 = vsub.f32 %v642, %v656
        %v658 = vmul.f32 %v657, %v657
        %v659 = vsel %vm645, %v658, 0.0
        %660 = vadd.xlane.f32.xlu0 %v659
        %v661 = vpop.xlane.xlu0 %660
        %v662 = vmul.f32 %v661, %v655
        %v663 = vadd.f32 %v662, 1e-05
        %v664 = vrsqrt.pop %v663
        %v665 = vmul.f32 %v664, %v663
        %v666 = vmul.f32 %v665, %v664
        %v667 = vmul.f32 0.5, %v666
        %v668 = vsub.f32 1.5, %v667
        %v669 = vmul.f32 %v664, %v668
        %vm670 = vweird.f32 %v663
        %vm671 = vweird.f32 %v664
        %vm672 = vmor %vm670, %vm671
        %v673 = vsel %vm672, %v664, %v669
        %v674 = vmul.f32 %v657, %v673
        %v676 = vperm.slane %v643, 0
        %v678 = vmul.f32 %v674, %v676
        %v680 = vperm.slane %v644, 0
        %v682 = vadd.f32 %v678, %v680
        %v683 = vld [vmem:[%s4] sm:$0xff]
        %v684 = vld [vmem:[%s4 + $0x8] sm:$0xff]
        %v685 = vld [vmem:[%s4 + $0x10] sm:$0xff]
        %v686 = vld [vmem:[%s4 + $0x18] sm:$0xff]
        %v687 = vld [vmem:[%s5] sm:$0x1]
        %v689 = vperm.slane %v687, 0
        %v692 = vsel %vm645, %v682, 0
        %694 = vmatpush.msra.mxu0 0.0
        %695 = vmatpush.msra.mxu0 0.0
        %696 = vmatpush.msra.mxu0 0.0
        %697 = vmatpush.msra.mxu0 0.0
        %698 = vmatpush.msra.mxu0 0.0
        %699 = vmatpush.msra.mxu0 0.0
        %700 = vmatpush.msra.mxu0 0.0
        %701 = vmatpush.msra.mxu0 0.0
        %702 = vmatpush.msra.mxu0 0.0
        %703 = vmatpush.msra.mxu0 0.0
        %704 = vmatpush.msra.mxu0 0.0
        %705 = vmatpush.msra.mxu0 0.0
        %706 = vmatpush.msra.mxu0 %v686
        %707 = vmatpush.msra.mxu0 %v685
        %708 = vmatpush.msra.mxu0 %v684
        %709 = vmatpush.msra.mxu0 %v683
        %710 = vmatmul.f32.gmra.mxu0 %v692
        %v711 = vpop.f32.mrf.mxu0
        %v712 = vadd.f32 %v689, %v711
        %713 = vdwg.mxu0
        %v714 = vmul.f32 %v712, 0.35355338
        %v715 = vld [vmem:[%s6] sm:$0xff]
        %v716 = vld [vmem:[%s6 + $0x8] sm:$0xff]
        %v717 = vld [vmem:[%s6 + $0x10] sm:$0xff]
        %v718 = vld [vmem:[%s6 + $0x18] sm:$0xff]
        %v719 = vld [vmem:[%s7] sm:$0x1]
        %v721 = vperm.slane %v719, 0
        %723 = vmatpush.msra.mxu0 0.0
        %724 = vmatpush.msra.mxu0 0.0
        %725 = vmatpush.msra.mxu0 0.0
        %726 = vmatpush.msra.mxu0 0.0
        %727 = vmatpush.msra.mxu0 0.0
        %728 = vmatpush.msra.mxu0 0.0
        %729 = vmatpush.msra.mxu0 0.0
        %730 = vmatpush.msra.mxu0 0.0
        %731 = vmatpush.msra.mxu0 0.0
        %732 = vmatpush.msra.mxu0 0.0
        %733 = vmatpush.msra.mxu0 0.0
        %734 = vmatpush.msra.mxu0 0.0
        %735 = vmatpush.msra.mxu0 %v718
        %736 = vmatpush.msra.mxu0 %v717
        %737 = vmatpush.msra.mxu0 %v716
        %738 = vmatpush.msra.mxu0 %v715
        %739 = vmatmul.f32.gmra.mxu0 %v692
        %v740 = vpop.f32.mrf.mxu0
        %v741 = vadd.f32 %v721, %v740
        %742 = vdwg.mxu0
        %v743 = vld [vmem:[%s8] sm:$0xff]
        %v744 = vld [vmem:[%s8 + $0x8] sm:$0xff]
        %v745 = vld [vmem:[%s8 + $0x10] sm:$0xff]
        %v746 = vld [vmem:[%s8 + $0x18] sm:$0xff]
        %v747 = vld [vmem:[%s9] sm:$0x1]
        %v749 = vperm.slane %v747, 0
        %751 = vmatpush.msra.mxu0 0.0
        %752 = vmatpush.msra.mxu0 0.0
        %753 = vmatpush.msra.mxu0 0.0
        %754 = vmatpush.msra.mxu0 0.0
        %755 = vmatpush.msra.mxu0 0.0
        %756 = vmatpush.msra.mxu0 0.0
        %757 = vmatpush.msra.mxu0 0.0
        %758 = vmatpush.msra.mxu0 0.0
        %759 = vmatpush.msra.mxu0 0.0
        %760 = vmatpush.msra.mxu0 0.0
        %761 = vmatpush.msra.mxu0 0.0
        %762 = vmatpush.msra.mxu0 0.0
        %763 = vmatpush.msra.mxu0 %v746
        %764 = vmatpush.msra.mxu0 %v745
        %765 = vmatpush.msra.mxu0 %v744
        %766 = vmatpush.msra.mxu0 %v743
        %767 = vmatmul.f32.gmra.mxu0 %v692
        %v768 = vpop.f32.mrf.mxu0
        %v769 = vadd.f32 %v749, %v768
        %770 = vdwg.mxu0
        %v771 = vld [vmem:[%s579] sm:$0x1]
        %v772 = vld [vmem:[%s10] sm:$0xff]
        %v773 = vld [vmem:[%s10 + $0x8] sm:$0xff]
        %v774 = vld [vmem:[%s10 + $0x10] sm:$0xff]
        %v775 = vld [vmem:[%s10 + $0x18] sm:$0xff]
        %vm776 = vcmask 64512
        %v778 = vsel %vm776, %v714, 0
        %v781 = vsel %vm776, %v741, 0
        %783 = vmatpush.xpose.msra.mxu0 0.0
        %784 = vmatpush.xpose.msra.mxu0 0.0
        %785 = vmatpush.xpose.msra.mxu0 0.0
        %786 = vmatpush.xpose.msra.mxu0 0.0
        %787 = vmatpush.xpose.msra.mxu0 0.0
        %788 = vmatpush.xpose.msra.mxu0 0.0
        %789 = vmatpush.xpose.msra.mxu0 0.0
        %790 = vmatpush.xpose.msra.mxu0 0.0
        %791 = vmatpush.xpose.msra.mxu0 0.0
        %792 = vmatpush.xpose.msra.mxu0 0.0
        %793 = vmatpush.xpose.msra.mxu0 0.0
        %794 = vmatpush.xpose.msra.mxu0 0.0
        %795 = vmatpush.xpose.msra.mxu0 0.0
        %796 = vmatpush.xpose.msra.mxu0 0.0
        %797 = vmatpush.xpose.msra.mxu0 0.0
        %798 = vmatpush.xpose.msra.mxu0 %v781
        %799 = vmatmul.f32.gmra.mxu0 %v778
        %v800 = vpop.f32.mrf.mxu0
        %v801 = vadd.f32 0.0, %v800
        %802 = vdwg.mxu0
        %vm803 = vcmp.ne.s32.totalorder %v771, 0
        %v804 = vsel %vm803, 1, 0
        %v805 = vperm.slane %v804, 0
        %vm806 = vcmp.eq.s32.totalorder %v805, 1
        %v807 = vsel %vm806, -1e+30, %v801
        %v808 = vsel %vm776, %v807, -inf
        %809 = vmax.xlane.f32.xlu0 %v808
        %v810 = vpop.xlane.xlu0 %809
        %v811 = vsub.f32 %v807, %v810
        %v812 = vmul.f32 %v811, 1.442695
        %v813 = vpow.pop %v812
        %v814 = vsel %vm776, %v813, 0.0
        %815 = vadd.xlane.f32.xlu0 %v814
        %v816 = vpop.xlane.xlu0 %815
        %v817 = vrcp.pop %v816
        %v818 = vmul.f32 %v813, %v817
        %v820 = vsel %vm776, %v818, 0
        %822 = vmatpush.msra.mxu0 0.0
        %823 = vmatpush.msra.mxu0 0.0
        %824 = vmatpush.msra.mxu0 0.0
        %825 = vmatpush.msra.mxu0 0.0
        %826 = vmatpush.msra.mxu0 0.0
        %827 = vmatpush.msra.mxu0 0.0
        %828 = vmatpush.msra.mxu0 0.0
        %829 = vmatpush.msra.mxu0 0.0
        %830 = vmatpush.msra.mxu0 0.0
        %831 = vmatpush.msra.mxu0 0.0
        %832 = vmatpush.msra.mxu0 0.0
        %833 = vmatpush.msra.mxu0 0.0
        %834 = vmatpush.msra.mxu0 0.0
        %835 = vmatpush.msra.mxu0 0.0
        %836 = vmatpush.msra.mxu0 0.0
        %837 = vmatpush.msra.mxu0 %v769
        %838 = vmatmul.f32.gmra.mxu0 %v820
        %v839 = vpop.f32.mrf.mxu0
        %v840 = vadd.f32 0.0, %v839
        %841 = vdwg.mxu0
        %842 = vrot.lane.b32.xlu0 %v714, 120
        %v843 = vpop.permute.xlu0 %842
        %844 = vrot.lane.b32.xlu0 %v741, 120
        %v845 = vpop.permute.xlu0 %844
        %v846 = vsel %vm776, %v843, 0
        %v848 = vsel %vm776, %v845, 0
        %850 = vmatpush.xpose.msra.mxu0 0.0
        %851 = vmatpush.xpose.msra.mxu0 0.0
        %852 = vmatpush.xpose.msra.mxu0 0.0
        %853 = vmatpush.xpose.msra.mxu0 0.0
        %854 = vmatpush.xpose.msra.mxu0 0.0
        %855 = vmatpush.xpose.msra.mxu0 0.0
        %856 = vmatpush.xpose.msra.mxu0 0.0
        %857 = vmatpush.xpose.msra.mxu0 0.0
        %858 = vmatpush.xpose.msra.mxu0 0.0
        %859 = vmatpush.xpose.msra.mxu0 0.0
        %860 = vmatpush.xpose.msra.mxu0 0.0
        %861 = vmatpush.xpose.msra.mxu0 0.0
        %862 = vmatpush.xpose.msra.mxu0 0.0
        %863 = vmatpush.xpose.msra.mxu0 0.0
        %864 = vmatpush.xpose.msra.mxu0 0.0
        %865 = vmatpush.xpose.msra.mxu0 %v848
        %866 = vmatmul.f32.gmra.mxu0 %v846
        %v867 = vpop.f32.mrf.mxu0
        %v868 = vadd.f32 0.0, %v867
        %869 = vdwg.mxu0
        %v870 = vsel %vm806, -1e+30, %v868
        %v871 = vsel %vm776, %v870, -inf
        %872 = vmax.xlane.f32.xlu0 %v871
        %v873 = vpop.xlane.xlu0 %872
        %v874 = vsub.f32 %v870, %v873
        %v875 = vmul.f32 %v874, 1.442695
        %v876 = vpow.pop %v875
        %v877 = vsel %vm776, %v876, 0.0
        %878 = vadd.xlane.f32.xlu0 %v877
        %v879 = vpop.xlane.xlu0 %878
        %v880 = vrcp.pop %v879
        %v881 = vmul.f32 %v876, %v880
        %883 = vrot.lane.b32.xlu0 %v769, 120
        %v884 = vpop.permute.xlu0 %883
        %v887 = vsel %vm776, %v881, 0
        %889 = vmatpush.msra.mxu0 0.0
        %890 = vmatpush.msra.mxu0 0.0
        %891 = vmatpush.msra.mxu0 0.0
        %892 = vmatpush.msra.mxu0 0.0
        %893 = vmatpush.msra.mxu0 0.0
        %894 = vmatpush.msra.mxu0 0.0
        %895 = vmatpush.msra.mxu0 0.0
        %896 = vmatpush.msra.mxu0 0.0
        %897 = vmatpush.msra.mxu0 0.0
        %898 = vmatpush.msra.mxu0 0.0
        %899 = vmatpush.msra.mxu0 0.0
        %900 = vmatpush.msra.mxu0 0.0
        %901 = vmatpush.msra.mxu0 0.0
        %902 = vmatpush.msra.mxu0 0.0
        %903 = vmatpush.msra.mxu0 0.0
        %904 = vmatpush.msra.mxu0 %v884
        %905 = vmatmul.f32.gmra.mxu0 %v887
        %v906 = vpop.f32.mrf.mxu0
        %v907 = vadd.f32 0.0, %v906
        %908 = vdwg.mxu0
        %v910 = vsel %vm776, %v907, 0
        %912 = vmatpush.msra.mxu0 0.0
        %913 = vmatpush.msra.mxu0 0.0
        %914 = vmatpush.msra.mxu0 0.0
        %915 = vmatpush.msra.mxu0 0.0
        %916 = vmatpush.msra.mxu0 0.0
        %917 = vmatpush.msra.mxu0 0.0
        %918 = vmatpush.msra.mxu0 0.0
        %919 = vmatpush.msra.mxu0 0.0
        %920 = vmatpush.msra.mxu0 0.0
        %921 = vmatpush.msra.mxu0 0.0
        %922 = vmatpush.msra.mxu0 0.0
        %923 = vmatpush.msra.mxu0 0.0
        %924 = vmatpush.msra.mxu0 0.0
        %925 = vmatpush.msra.mxu0 0.0
        %926 = vmatpush.msra.mxu0 0.0
        %927 = vmatpush.msra.mxu0 %v773
        %928 = vmatmul.f32.gmra.mxu0 %v910
        %v929 = vpop.f32.mrf.mxu0
        %v930 = vadd.f32 0.0, %v929
        %931 = vdwg.mxu0
        %v933 = vsel %vm776, %v840, 0
        %935 = vmatpush.msra.mxu0 0.0
        %936 = vmatpush.msra.mxu0 0.0
        %937 = vmatpush.msra.mxu0 0.0
        %938 = vmatpush.msra.mxu0 0.0
        %939 = vmatpush.msra.mxu0 0.0
        %940 = vmatpush.msra.mxu0 0.0
        %941 = vmatpush.msra.mxu0 0.0
        %942 = vmatpush.msra.mxu0 0.0
        %943 = vmatpush.msra.mxu0 0.0
        %944 = vmatpush.msra.mxu0 0.0
        %945 = vmatpush.msra.mxu0 0.0
        %946 = vmatpush.msra.mxu0 0.0
        %947 = vmatpush.msra.mxu0 0.0
        %948 = vmatpush.msra.mxu0 0.0
        %949 = vmatpush.msra.mxu0 0.0
        %950 = vmatpush.msra.mxu0 %v772
        %951 = vmatmul.f32.gmra.mxu0 %v933
        %v952 = vpop.f32.mrf.mxu0
        %v953 = vadd.f32 %v930, %v952
        %954 = vdwg.mxu0
        %955 = vrot.lane.b32.xlu0 %v714, 112
        %v956 = vpop.permute.xlu0 %955
        %957 = vrot.lane.b32.xlu0 %v741, 112
        %v958 = vpop.permute.xlu0 %957
        %v959 = vsel %vm776, %v956, 0
        %v961 = vsel %vm776, %v958, 0
        %963 = vmatpush.xpose.msra.mxu0 0.0
        %964 = vmatpush.xpose.msra.mxu0 0.0
        %965 = vmatpush.xpose.msra.mxu0 0.0
        %966 = vmatpush.xpose.msra.mxu0 0.0
        %967 = vmatpush.xpose.msra.mxu0 0.0
        %968 = vmatpush.xpose.msra.mxu0 0.0
        %969 = vmatpush.xpose.msra.mxu0 0.0
        %970 = vmatpush.xpose.msra.mxu0 0.0
        %971 = vmatpush.xpose.msra.mxu0 0.0
        %972 = vmatpush.xpose.msra.mxu0 0.0
        %973 = vmatpush.xpose.msra.mxu0 0.0
        %974 = vmatpush.xpose.msra.mxu0 0.0
        %975 = vmatpush.xpose.msra.mxu0 0.0
        %976 = vmatpush.xpose.msra.mxu0 0.0
        %977 = vmatpush.xpose.msra.mxu0 0.0
        %978 = vmatpush.xpose.msra.mxu0 %v961
        %979 = vmatmul.f32.gmra.mxu0 %v959
        %v980 = vpop.f32.mrf.mxu0
        %v981 = vadd.f32 0.0, %v980
        %982 = vdwg.mxu0
        %v983 = vsel %vm806, -1e+30, %v981
        %v984 = vsel %vm776, %v983, -inf
        %985 = vmax.xlane.f32.xlu0 %v984
        %v986 = vpop.xlane.xlu0 %985
        %v987 = vsub.f32 %v983, %v986
        %v988 = vmul.f32 %v987, 1.442695
        %v989 = vpow.pop %v988
        %v990 = vsel %vm776, %v989, 0.0
        %991 = vadd.xlane.f32.xlu0 %v990
        %v992 = vpop.xlane.xlu0 %991
        %v993 = vrcp.pop %v992
        %v994 = vmul.f32 %v989, %v993
        %995 = vrot.lane.b32.xlu0 %v769, 112
        %v996 = vpop.permute.xlu0 %995
        %v999 = vsel %vm776, %v994, 0
        %1001 = vmatpush.msra.mxu0 0.0
        %1002 = vmatpush.msra.mxu0 0.0
        %1003 = vmatpush.msra.mxu0 0.0
        %1004 = vmatpush.msra.mxu0 0.0
        %1005 = vmatpush.msra.mxu0 0.0
        %1006 = vmatpush.msra.mxu0 0.0
        %1007 = vmatpush.msra.mxu0 0.0
        %1008 = vmatpush.msra.mxu0 0.0
        %1009 = vmatpush.msra.mxu0 0.0
        %1010 = vmatpush.msra.mxu0 0.0
        %1011 = vmatpush.msra.mxu0 0.0
        %1012 = vmatpush.msra.mxu0 0.0
        %1013 = vmatpush.msra.mxu0 0.0
        %1014 = vmatpush.msra.mxu0 0.0
        %1015 = vmatpush.msra.mxu0 0.0
        %1016 = vmatpush.msra.mxu0 %v996
        %1017 = vmatmul.f32.gmra.mxu0 %v999
        %v1018 = vpop.f32.mrf.mxu0
        %v1019 = vadd.f32 0.0, %v1018
        %1020 = vdwg.mxu0
        %v1022 = vsel %vm776, %v1019, 0
        %1024 = vmatpush.msra.mxu0 0.0
        %1025 = vmatpush.msra.mxu0 0.0
        %1026 = vmatpush.msra.mxu0 0.0
        %1027 = vmatpush.msra.mxu0 0.0
        %1028 = vmatpush.msra.mxu0 0.0
        %1029 = vmatpush.msra.mxu0 0.0
        %1030 = vmatpush.msra.mxu0 0.0
        %1031 = vmatpush.msra.mxu0 0.0
        %1032 = vmatpush.msra.mxu0 0.0
        %1033 = vmatpush.msra.mxu0 0.0
        %1034 = vmatpush.msra.mxu0 0.0
        %1035 = vmatpush.msra.mxu0 0.0
        %1036 = vmatpush.msra.mxu0 0.0
        %1037 = vmatpush.msra.mxu0 0.0
        %1038 = vmatpush.msra.mxu0 0.0
        %1039 = vmatpush.msra.mxu0 %v774
        %1040 = vmatmul.f32.gmra.mxu0 %v1022
        %v1041 = vpop.f32.mrf.mxu0
        %v1042 = vadd.f32 0.0, %v1041
        %1043 = vdwg.mxu0
        %v1044 = vadd.f32 %v953, %v1042
        %1045 = vrot.lane.b32.xlu0 %v714, 104
        %v1046 = vpop.permute.xlu0 %1045
        %1047 = vrot.lane.b32.xlu0 %v741, 104
        %v1048 = vpop.permute.xlu0 %1047
        %v1049 = vsel %vm776, %v1046, 0
        %v1051 = vsel %vm776, %v1048, 0
        %1053 = vmatpush.xpose.msra.mxu0 0.0
        %1054 = vmatpush.xpose.msra.mxu0 0.0
        %1055 = vmatpush.xpose.msra.mxu0 0.0
        %1056 = vmatpush.xpose.msra.mxu0 0.0
        %1057 = vmatpush.xpose.msra.mxu0 0.0
        %1058 = vmatpush.xpose.msra.mxu0 0.0
        %1059 = vmatpush.xpose.msra.mxu0 0.0
        %1060 = vmatpush.xpose.msra.mxu0 0.0
        %1061 = vmatpush.xpose.msra.mxu0 0.0
        %1062 = vmatpush.xpose.msra.mxu0 0.0
        %1063 = vmatpush.xpose.msra.mxu0 0.0
        %1064 = vmatpush.xpose.msra.mxu0 0.0
        %1065 = vmatpush.xpose.msra.mxu0 0.0
        %1066 = vmatpush.xpose.msra.mxu0 0.0
        %1067 = vmatpush.xpose.msra.mxu0 0.0
        %1068 = vmatpush.xpose.msra.mxu0 %v1051
        %1069 = vmatmul.f32.gmra.mxu0 %v1049
        %v1070 = vpop.f32.mrf.mxu0
        %v1071 = vadd.f32 0.0, %v1070
        %1072 = vdwg.mxu0
        %v1073 = vsel %vm806, -1e+30, %v1071
        %v1074 = vsel %vm776, %v1073, -inf
        %1075 = vmax.xlane.f32.xlu0 %v1074
        %v1076 = vpop.xlane.xlu0 %1075
        %v1077 = vsub.f32 %v1073, %v1076
        %v1078 = vmul.f32 %v1077, 1.442695
        %v1079 = vpow.pop %v1078
        %v1080 = vsel %vm776, %v1079, 0.0
        %1081 = vadd.xlane.f32.xlu0 %v1080
        %v1082 = vpop.xlane.xlu0 %1081
        %v1083 = vrcp.pop %v1082
        %v1084 = vmul.f32 %v1079, %v1083
        %1085 = vrot.lane.b32.xlu0 %v769, 104
        %v1086 = vpop.permute.xlu0 %1085
        %v1089 = vsel %vm776, %v1084, 0
        %1091 = vmatpush.msra.mxu0 0.0
        %1092 = vmatpush.msra.mxu0 0.0
        %1093 = vmatpush.msra.mxu0 0.0
        %1094 = vmatpush.msra.mxu0 0.0
        %1095 = vmatpush.msra.mxu0 0.0
        %1096 = vmatpush.msra.mxu0 0.0
        %1097 = vmatpush.msra.mxu0 0.0
        %1098 = vmatpush.msra.mxu0 0.0
        %1099 = vmatpush.msra.mxu0 0.0
        %1100 = vmatpush.msra.mxu0 0.0
        %1101 = vmatpush.msra.mxu0 0.0
        %1102 = vmatpush.msra.mxu0 0.0
        %1103 = vmatpush.msra.mxu0 0.0
        %1104 = vmatpush.msra.mxu0 0.0
        %1105 = vmatpush.msra.mxu0 0.0
        %1106 = vmatpush.msra.mxu0 %v1086
        %1107 = vmatmul.f32.gmra.mxu0 %v1089
        %v1108 = vpop.f32.mrf.mxu0
        %v1109 = vadd.f32 0.0, %v1108
        %1110 = vdwg.mxu0
        %v1112 = vsel %vm776, %v1109, 0
        %1114 = vmatpush.msra.mxu0 0.0
        %1115 = vmatpush.msra.mxu0 0.0
        %1116 = vmatpush.msra.mxu0 0.0
        %1117 = vmatpush.msra.mxu0 0.0
        %1118 = vmatpush.msra.mxu0 0.0
        %1119 = vmatpush.msra.mxu0 0.0
        %1120 = vmatpush.msra.mxu0 0.0
        %1121 = vmatpush.msra.mxu0 0.0
        %1122 = vmatpush.msra.mxu0 0.0
        %1123 = vmatpush.msra.mxu0 0.0
        %1124 = vmatpush.msra.mxu0 0.0
        %1125 = vmatpush.msra.mxu0 0.0
        %1126 = vmatpush.msra.mxu0 0.0
        %1127 = vmatpush.msra.mxu0 0.0
        %1128 = vmatpush.msra.mxu0 0.0
        %1129 = vmatpush.msra.mxu0 %v775
        %1130 = vmatmul.f32.gmra.mxu0 %v1112
        %v1131 = vpop.f32.mrf.mxu0
        %v1132 = vadd.f32 0.0, %v1131
        %1133 = vdwg.mxu0
        %v1134 = vadd.f32 %v1044, %v1132
        %v1135 = vadd.f32 %v642, %v1134
        %v1136 = vld [vmem:[%s11] sm:$0x1]
        %v1138 = vperm.slane %v1136, 0
        %v1140 = vadd.f32 %v1135, %v1138
        %v1141 = vld [vmem:[%s12] sm:$0x1]
        %v1142 = vld [vmem:[%s13] sm:$0x1]
        %v1143 = vsel %vm645, %v1140, 0.0
        %1144 = vadd.xlane.f32.xlu0 %v1143
        %v1145 = vpop.xlane.xlu0 %1144
        %v1146 = vmul.f32 %v1145, %v655
        %v1147 = vsub.f32 %v1140, %v1146
        %v1148 = vmul.f32 %v1147, %v1147
        %v1149 = vsel %vm645, %v1148, 0.0
        %1150 = vadd.xlane.f32.xlu0 %v1149
        %v1151 = vpop.xlane.xlu0 %1150
        %v1152 = vmul.f32 %v1151, %v655
        %v1153 = vadd.f32 %v1152, 1e-05
        %v1154 = vrsqrt.pop %v1153
        %v1155 = vmul.f32 %v1154, %v1153
        %v1156 = vmul.f32 %v1155, %v1154
        %v1157 = vmul.f32 0.5, %v1156
        %v1158 = vsub.f32 1.5, %v1157
        %v1159 = vmul.f32 %v1154, %v1158
        %vm1160 = vweird.f32 %v1153
        %vm1161 = vweird.f32 %v1154
        %vm1162 = vmor %vm1160, %vm1161
        %v1163 = vsel %vm1162, %v1154, %v1159
        %v1164 = vmul.f32 %v1147, %v1163
        %v1166 = vperm.slane %v1141, 0
        %v1168 = vmul.f32 %v1164, %v1166
        %v1170 = vperm.slane %v1142, 0
        %v1172 = vadd.f32 %v1168, %v1170
        %v1173 = vld [vmem:[%s14] sm:$0xff]
        %v1174 = vld [vmem:[%s14 + $0x8] sm:$0xff]
        %v1175 = vld [vmem:[%s14 + $0x10] sm:$0xff]
        %v1176 = vld [vmem:[%s14 + $0x18] sm:$0xff]
        %v1177 = vld [vmem:[%s15] sm:$0x1]
        %v1179 = vperm.slane %v1177, 0
        %v1182 = vsel %vm645, %v1172, 0
        %1184 = vmatpush.msra.mxu0 0.0
        %1185 = vmatpush.msra.mxu0 0.0
        %1186 = vmatpush.msra.mxu0 0.0
        %1187 = vmatpush.msra.mxu0 0.0
        %1188 = vmatpush.msra.mxu0 0.0
        %1189 = vmatpush.msra.mxu0 0.0
        %1190 = vmatpush.msra.mxu0 0.0
        %1191 = vmatpush.msra.mxu0 0.0
        %1192 = vmatpush.msra.mxu0 0.0
        %1193 = vmatpush.msra.mxu0 0.0
        %1194 = vmatpush.msra.mxu0 0.0
        %1195 = vmatpush.msra.mxu0 0.0
        %1196 = vmatpush.msra.mxu0 %v1176
        %1197 = vmatpush.msra.mxu0 %v1175
        %1198 = vmatpush.msra.mxu0 %v1174
        %1199 = vmatpush.msra.mxu0 %v1173
        %1200 = vmatmul.f32.gmra.mxu0 %v1182
        %v1201 = vpop.f32.mrf.mxu0
        %v1202 = vadd.f32 %v1179, %v1201
        %1203 = vdwg.mxu0
        %v1204 = vmul.f32 %v1202, 0.5
        %v1205 = vmul.f32 %v1202, 0.044715
        %v1206 = vmul.f32 %v1205, %v1202
        %v1207 = vmul.f32 %v1206, %v1202
        %v1208 = vadd.f32 %v1202, %v1207
        %v1209 = vmul.f32 %v1208, 0.7978846
        %v1210 = vtanh.pop %v1209
        %v1211 = vadd.f32 %v1210, 1.0
        %v1212 = vmul.f32 %v1204, %v1211
        %v1213 = vld [vmem:[%s16] sm:$0xff]
        %v1214 = vld [vmem:[%s16 + $0x8] sm:$0xff]
        %v1215 = vld [vmem:[%s16 + $0x10] sm:$0xff]
        %v1216 = vld [vmem:[%s16 + $0x18] sm:$0xff]
        %v1217 = vld [vmem:[%s16 + $0x20] sm:$0xff]
        %v1218 = vld [vmem:[%s16 + $0x28] sm:$0xff]
        %v1219 = vld [vmem:[%s16 + $0x30] sm:$0xff]
        %v1220 = vld [vmem:[%s16 + $0x38] sm:$0xff]
        %v1221 = vld [vmem:[%s16 + $0x40] sm:$0xff]
        %v1222 = vld [vmem:[%s16 + $0x48] sm:$0xff]
        %v1223 = vld [vmem:[%s16 + $0x50] sm:$0xff]
        %v1224 = vld [vmem:[%s16 + $0x58] sm:$0xff]
        %v1225 = vld [vmem:[%s16 + $0x60] sm:$0xff]
        %v1226 = vld [vmem:[%s16 + $0x68] sm:$0xff]
        %v1227 = vld [vmem:[%s16 + $0x70] sm:$0xff]
        %v1228 = vld [vmem:[%s16 + $0x78] sm:$0xff]
        %v1229 = vld [vmem:[%s17] sm:$0x1]
        %v1231 = vperm.slane %v1229, 0
        %1233 = vmatpush.msra.mxu0 %v1228
        %1234 = vmatpush.msra.mxu0 %v1227
        %1235 = vmatpush.msra.mxu0 %v1226
        %1236 = vmatpush.msra.mxu0 %v1225
        %1237 = vmatpush.msra.mxu0 %v1224
        %1238 = vmatpush.msra.mxu0 %v1223
        %1239 = vmatpush.msra.mxu0 %v1222
        %1240 = vmatpush.msra.mxu0 %v1221
        %1241 = vmatpush.msra.mxu0 %v1220
        %1242 = vmatpush.msra.mxu0 %v1219
        %1243 = vmatpush.msra.mxu0 %v1218
        %1244 = vmatpush.msra.mxu0 %v1217
        %1245 = vmatpush.msra.mxu0 %v1216
        %1246 = vmatpush.msra.mxu0 %v1215
        %1247 = vmatpush.msra.mxu0 %v1214
        %1248 = vmatpush.msra.mxu0 %v1213
        %1249 = vmatmul.f32.gmra.mxu0 %v1212
        %v1250 = vpop.f32.mrf.mxu0
        %v1251 = vadd.f32 %v1231, %v1250
        %1252 = vdwg.mxu0
        %v1253 = vadd.f32 %v1140, %v1251
        %1254 = vst.msk [vmem:[%s641] sm:$0xff] %vm645, %v1253
        %s1255 = sand.u32 %s434, 1
        %s1256 = scalar_lea.sflag [#allocation4], %s1255
        %s1257 = sand.u32 %s434, 1
        %s1258 = smul.addr %s1257, 8
        %s1259 = scalar_lea.vmem [#allocation8], %s1258
        // Predicated region
        $region105: #{tpu_custom_call.1} parent=91 // pred_check
          %p1260 = pneg %p444
        $region106: #{tpu_custom_call.1} parent=91 // pred_check_branch
          %1262 = sbr.rel (%p1260) target = $region108
        $region107: #{tpu_custom_call.1} parent=91 // pred_region
          %1264 = vsyncadd %s1256, 0
          %s1265 = smul.addr %s38, 8
          %s1266 = scalar_lea.hbm %s18, %s1265
          %s1268 = sshll.u32 %s1259, 4
          %s1269 = int_to_ptr.vmem [resolvable:$true] %s1268
          %s1270 = sshll.u32 %s1266, 4
          %s1271 = int_to_ptr.hbm [resolvable:$true] %s1270
          %1273 = dma.vmem_to_hbm [thread:$0]  %s1269, 128, %s1271, %s1256
        $region108: #{tpu_custom_call.1} parent=91 // pred_fallthru
          _
      $region92: #{tpu_custom_call.1} parent=5 // pred_fallthru
        _
      %p1274 = scmp.le.s32.totalorder 2, %s33
      // Predicated region
      $region109: #{tpu_custom_call.1} parent=5 // pred_check
        %p1275 = pneg %p1274
      $region110: #{tpu_custom_call.1} parent=5 // pred_check_branch
        %1277 = sbr.rel (%p1275) target = $region112
      $region111: #{tpu_custom_call.1} parent=5 // pred_region
        %s1278 = ssub.s32 %s33, 2
        // Predicated region
        $region113: #{tpu_custom_call.1} parent=111 // pred_check
          %p1279 = pneg %p450
        $region114: #{tpu_custom_call.1} parent=111 // pred_check_branch
          %1281 = sbr.rel (%p1279) target = $region116
        $region115: #{tpu_custom_call.1} parent=111 // pred_region
          %s1282 = sand.u32 %s435, 1
          %s1283 = scalar_lea.sflag [#allocation4], %s1282
          %s1284 = sand.u32 %s435, 1
          %s1285 = smul.addr %s1284, 8
          %s1286 = scalar_lea.vmem [#allocation8], %s1285
          %1288 = dma.done %s1283, 128
        $region116: #{tpu_custom_call.1} parent=111 // pred_fallthru
          _
      $region112: #{tpu_custom_call.1} parent=5 // pred_fallthru
        _
    $region6: #{tpu_custom_call.1} parent=1 // loop_footer
      %s37 = sadd.s32 1, %s33
    $region7: #{tpu_custom_call.1} parent=1 // loop_footer_branch
      %32 = sbr.rel target = $region3
    $region8: #{tpu_custom_call.1} parent=1 // loop_exit
      _
    %1289 = vsyncpa [#allocation3], 1
    %s1290 = scalar_lea.sflag [#allocation3], 1
    %1291 = vsyncpa %s1290, 1
    %1292 = vsyncpa [#allocation6], 1
    %s1293 = scalar_lea.sflag [#allocation6], 1
    %1294 = vsyncpa %s1293, 1
    %1295 = vsyncpa [#allocation4], 1
    %s1296 = scalar_lea.sflag [#allocation4], 1
    %1297 = vsyncpa %s1296, 1

</llo_original>
